<compile_context>
chip_gen: v5e
topology: v5e:2x2
jax: 0.10.0
libtpu: 0.0.40
codegen_flags: <defaults>
</compile_context>

<pallas_src>
import math
import functools

import jax
import jax.numpy as jnp
from jax.experimental import pallas as pl
from jax.experimental.pallas import tpu as pltpu


# ----------------------------- padding helper (same semantics as torch ref) ----
def pad_same(size, kernel_size, stride, dilation):
    o = math.ceil(size / stride)
    pad = max((o - 1) * stride + (kernel_size - 1) * dilation + 1 - size, 0)
    pad_0 = pad // 2
    pad_1 = pad - pad_0
    return (pad, pad_0, pad_1)


# ----------------------------- Pallas kernel: stacked-tap fused GEMM -----------
def _conv_fused_kernel(x_ref, halo_ref, w_ref, b_ref, o_ref, xs_ref, *,
                       offsets, tm, cin_p):
    """One (image, hw-block) grid step.

    x_ref:    (1, cin_p, tm)      bf16  flattened-spatial block of padded image
    halo_ref: (1, cin_p, halo_w)  bf16  right halo of this block (same HBM array)
    w_ref:    (Cout, T*cin_p)     bf16  fused tap weights (VMEM resident)
    b_ref:    (Cout, 1)           f32   bias column (VMEM resident)
    o_ref:    (1, Cout, tm)       lane-dense output block
    xs_ref:   (T*cin_p, tm)       bf16  scratch: stacked shifted windows
    """
    # Build the stacked GEMM operand: row band t holds the input shifted by that
    # tap's flattened offset.  Destination row bands start at multiples of
    # cin_p (a multiple of the bf16 sublane tile), so only lanes are masked.
    for t, off in enumerate(offsets):          # static unroll over KH*KW taps
        r = t * cin_p
        if off == 0:
            xs_ref[r:r + cin_p, :] = x_ref[0]
        else:
            xs_ref[r:r + cin_p, :tm - off] = x_ref[0, :, off:]
            xs_ref[r:r + cin_p, tm - off:] = halo_ref[0, :, :off]
    # Single fused MXU GEMM (K = KH*KW*cin_p), f32 accumulation, bias broadcast
    # over lanes; one store of the lane-dense (Cout, tm) block.
    acc = jnp.dot(w_ref[...], xs_ref[...], preferred_element_type=jnp.float32)
    o_ref[0] = (acc + b_ref[...]).astype(o_ref.dtype)


# ----------------------------- Conv2dSamePadding forward -----------------------
def conv2d_same_padding(x, weight, bias=None, *, stride=1, dilation=1,
                        tm=None, out_dtype=None):
    """x: (N, Cin, H, W); weight: (Cout, Cin, KH, KW); bias: (Cout,) or None."""
    N, Cin, H, W = x.shape
    Cout, Cin_w, KH, KW = weight.shape
    assert Cin == Cin_w, "groups > 1 not supported"   # TODO(synk): grouped conv

    _, ph0, ph1 = pad_same(H, KH, stride, dilation)
    _, pw0, pw1 = pad_same(W, KW, stride, dilation)
    OH, OW = math.ceil(H / stride), math.ceil(W / stride)
    Hp, Wp = H + ph0 + ph1, W + pw0 + pw1
    Lhw = Hp * Wp
    T = KH * KW

    # pad_same guarantee: valid output windows never wrap past a padded row /
    # the image end, so wrapped taps only affect candidates the crop discards.
    assert (OH - 1) * stride + (KH - 1) * dilation <= Hp - 1
    assert (OW - 1) * stride + (KW - 1) * dilation <= Wp - 1

    # Tap offsets within the flattened per-image (h, w) axis.
    offsets = tuple(kh * dilation * Wp + kw * dilation
                    for kh in range(KH) for kw in range(KW))
    max_off = max(offsets)
    halo_w = 128 * max(1, pl.cdiv(max_off, 128))      # lane-aligned halo width
    assert halo_w >= max_off

    # bf16 sublane-tile (16) aligned channel count -> aligned stacked-row bands.
    cin_p = 16 * pl.cdiv(Cin, 16)
    Kf = T * cin_p

    out_dtype = x.dtype if out_dtype is None else jnp.dtype(out_dtype)
    out_bytes = jnp.dtype(out_dtype).itemsize

    # ---- tile-size selection: VMEM-budget aware, halo-amortizing -------------
    if tm is None:
        budget = 16 * 2 ** 20                         # fits every gen's scoped VMEM default
        per_lane = (2 * cin_p * 2                     # x block (double-buffered, bf16)
                    + 2 * Cout * out_bytes            # out block (double-buffered)
                    + Kf * 2)                         # stacked scratch
        fixed = (2 * cin_p * halo_w * 2               # halo block (double-buffered)
                 + 2 * Cout * Kf * 2 + 2 * Cout * 4)  # weights + bias
        tm = max(halo_w, min(4096, (budget - fixed) // per_lane))
    # tm must be a multiple of halo_w (halo BlockSpec indexing) and no bigger
    # than the per-image candidate count rounded up (limits tail overcompute).
    tm = halo_w * max(1, min(tm // halo_w, pl.cdiv(Lhw, halo_w)))
    nblk = pl.cdiv(Lhw, tm)
    # v7x: keep >= 2 grid blocks so both TensorCores get work.
    if N * nblk < 2 and Lhw > halo_w:
        tm = halo_w * pl.cdiv(pl.cdiv(Lhw, 2), halo_w)
        nblk = pl.cdiv(Lhw, tm)
    ratio = tm // halo_w
    Lp = nblk * tm + halo_w

    # ---- input / weight prep (one cheap pass; cast to bf16 *before* moving) ---
    xb = x.astype(jnp.bfloat16)
    xf = jnp.pad(xb, ((0, 0), (0, 0), (ph0, ph1), (pw0, pw1)))
    xf = xf.reshape(N, Cin, Lhw)
    xf = jnp.pad(xf, ((0, 0), (0, cin_p - Cin), (0, Lp - Lhw)))   # (N, cin_p, Lp)

    # Fused weights: row index t*cin_p + c  <->  weight[o, c, kh, kw], t = kh*KW+kw.
    w_t = jnp.transpose(weight, (2, 3, 0, 1)).reshape(T, Cout, Cin)
    w_t = jnp.pad(w_t, ((0, 0), (0, 0), (0, cin_p - Cin)))
    w_fused = jnp.transpose(w_t, (1, 0, 2)).reshape(Cout, Kf).astype(jnp.bfloat16)

    b_col = (bias if bias is not None
             else jnp.zeros((Cout,), jnp.float32)).astype(jnp.float32).reshape(Cout, 1)

    # ---- explicit VMEM budget -> vmem_limit_bytes with headroom ----------------
    vmem_est = (2 * cin_p * tm * 2 + 2 * cin_p * halo_w * 2
                + 2 * Cout * Kf * 2 + 2 * Cout * 4
                + 2 * Cout * tm * out_bytes + Kf * tm * 2)
    vmem_limit = int(min(48 * 2 ** 20, max(2 * vmem_est, 16 * 2 ** 20)))

    kernel = functools.partial(_conv_fused_kernel,
                               offsets=offsets, tm=tm, cin_p=cin_p)
    out_flat = pl.pallas_call(
        kernel,
        out_shape=jax.ShapeDtypeStruct((N, Cout, nblk * tm), out_dtype),
        grid_spec=pltpu.PrefetchScalarGridSpec(
            num_scalar_prefetch=0,
            grid=(N, nblk),
            in_specs=[
                # Current flattened-spatial block of image n.
                pl.BlockSpec((1, cin_p, tm), lambda n, j: (n, 0, j)),
                # Its right halo: same HBM array, next halo_w lanes.
                pl.BlockSpec((1, cin_p, halo_w),
                             lambda n, j: (n, 0, (j + 1) * ratio)),
                pl.BlockSpec((Cout, Kf), lambda n, j: (0, 0)),   # fused weights (resident)
                pl.BlockSpec((Cout, 1), lambda n, j: (0, 0)),    # bias (resident)
            ],
            out_specs=pl.BlockSpec((1, Cout, tm), lambda n, j: (n, 0, j)),
            scratch_shapes=[pltpu.VMEM((Kf, tm), jnp.bfloat16)],
        ),
        compiler_params=pltpu.CompilerParams(
            dimension_semantics=("parallel", "parallel"),
            vmem_limit_bytes=vmem_limit),
    )(xf, xf, w_fused, b_col)

    # Crop the per-image candidate grid and subsample by stride.  No transpose:
    # the kernel already wrote the (N, Cout, spatial) layout.
    # TODO(synk): for stride > 1, build tap offsets over a strided index set
    #             instead of dense compute + subsample (stride^2 overcompute).
    cand = out_flat[:, :, :Lhw].reshape(N, Cout, Hp, Wp)
    out = jax.lax.slice(cand, (0, 0, 0, 0),
                        (N, Cout, (OH - 1) * stride + 1, (OW - 1) * stride + 1),
                        (1, 1, stride, stride))
    return out                                         # (N, Cout, OH, OW)


# ----------------------------- demo / self-check --------------------------------
if __name__ == "__main__":
    # Mirrors Conv2dSamePadding((16,16), 4, 8, 3, stride=1, dilation=1)
    image_size = (16, 16)
    in_channels, out_channels = 4, 8
    kernel_size, stride, dilation = 3, 1, 1
    batch = 2

    key = jax.random.PRNGKey(0)
    kx, kw, kb = jax.random.split(key, 3)

    x = jax.random.normal(kx, (batch, in_channels, *image_size), dtype=jnp.float32)

    fan_in = in_channels * kernel_size * kernel_size
    bound = 1.0 / math.sqrt(fan_in)
    weight = jax.random.uniform(kw, (out_channels, in_channels, kernel_size, kernel_size),
                                minval=-bound, maxval=bound, dtype=jnp.float32)
    bias = jax.random.uniform(kb, (out_channels,),
                              minval=-bound, maxval=bound, dtype=jnp.float32)

    fwd = jax.jit(functools.partial(conv2d_same_padding, stride=stride, dilation=dilation))
    out = fwd(x, weight, bias)
    jax.block_until_ready(out)

    # Reference: XLA conv with identical explicit padding; operands bf16-rounded
    # because the kernel computes bf16 x bf16 -> f32 on the MXU.
    xb = x.astype(jnp.bfloat16).astype(jnp.float32)
    wb = weight.astype(jnp.bfloat16).astype(jnp.float32)
    _, h0, h1 = pad_same(image_size[0], kernel_size, stride, dilation)
    _, w0, w1 = pad_same(image_size[1], kernel_size, stride, dilation)
    ref = jax.lax.conv_general_dilated(
        xb, wb,
        window_strides=(stride, stride),
        padding=((h0, h1), (w0, w1)),
        rhs_dilation=(dilation, dilation),
        dimension_numbers=("NCHW", "OIHW", "NCHW"),
        precision=jax.lax.Precision.HIGHEST,
    ) + bias[None, :, None, None]

    assert out.shape == ref.shape, (out.shape, ref.shape)
    max_err = float(jnp.max(jnp.abs(out - ref)))
    assert jnp.allclose(out, ref, rtol=1e-3, atol=1e-3), \
        f"mismatch vs reference conv (max err {max_err})"

    print("KERNEL_OK")
</pallas_src>

<mosaic_0001>
module attributes {stable_mosaic.version = 11 : i64} {
  func.func @_conv_fused_kernel(%arg0: i32, %arg1: i32, %arg2: memref<1x16x384xbf16, #tpu.memory_space<vmem>>, %arg3: memref<1x16x128xbf16, #tpu.memory_space<vmem>>, %arg4: memref<8x144xbf16, #tpu.memory_space<vmem>>, %arg5: memref<8x1xf32, #tpu.memory_space<vmem>>, %arg6: memref<1x8x384xf32, #tpu.memory_space<vmem>>, %arg7: memref<144x384xbf16, #tpu.memory_space<vmem>>) attributes {dimension_semantics = [#tpu.dimension_semantics<parallel>, #tpu.dimension_semantics<parallel>], iteration_bounds = array<i64: 2, 1>, scalar_prefetch = 0 : i64, scratch_operands = 1 : i64, tpu.core_type = #tpu.core_type<tc>, window_params = [{transform_indices = @transform_0, window_bounds = array<i64: 1, 16, 384>}, {transform_indices = @transform_1, window_bounds = array<i64: 1, 16, 128>}, {pipeline_mode = #tpu.pipeline_mode<synchronous>, transform_indices = @transform_2, window_bounds = array<i64: 8, 144>}, {pipeline_mode = #tpu.pipeline_mode<synchronous>, transform_indices = @transform_3, window_bounds = array<i64: 8, 1>}, {transform_indices = @transform_4, window_bounds = array<i64: 1, 8, 384>}]} {
    %c0 = arith.constant 0 : index
    %c0_0 = arith.constant 0 : index
    %c0_1 = arith.constant 0 : index
    %0 = vector.load %arg2[%c0, %c0_0, %c0_1] : memref<1x16x384xbf16, #tpu.memory_space<vmem>>, vector<1x16x384xbf16>
    %1 = vector.shape_cast %0 : vector<1x16x384xbf16> to vector<16x384xbf16>
    %c0_2 = arith.constant 0 : index
    %c0_3 = arith.constant 0 : index
    %2 = vector.load %arg7[%c0_2, %c0_3] : memref<144x384xbf16, #tpu.memory_space<vmem>>, vector<16x384xbf16>
    tpu.vector_store %arg7[%c0_2, %c0_3], %1 {strides = array<i32>} : memref<144x384xbf16, #tpu.memory_space<vmem>>, vector<16x384xbf16>,
    %c0_4 = arith.constant 0 : index
    %c0_5 = arith.constant 0 : index
    %c1 = arith.constant 1 : index
    %3 = vector.load %arg2[%c0_4, %c0_5, %c1] : memref<1x16x384xbf16, #tpu.memory_space<vmem>>, vector<1x16x383xbf16>
    %4 = vector.shape_cast %3 : vector<1x16x383xbf16> to vector<16x383xbf16>
    %c16 = arith.constant 16 : index
    %c0_6 = arith.constant 0 : index
    %5 = vector.load %arg7[%c16, %c0_6] : memref<144x384xbf16, #tpu.memory_space<vmem>>, vector<16x383xbf16>
    tpu.vector_store %arg7[%c16, %c0_6], %4 {strides = array<i32>} : memref<144x384xbf16, #tpu.memory_space<vmem>>, vector<16x383xbf16>,
    %c0_7 = arith.constant 0 : index
    %c0_8 = arith.constant 0 : index
    %c0_9 = arith.constant 0 : index
    %6 = vector.load %arg3[%c0_7, %c0_8, %c0_9] : memref<1x16x128xbf16, #tpu.memory_space<vmem>>, vector<1x16x1xbf16>
    %7 = vector.shape_cast %6 : vector<1x16x1xbf16> to vector<16x1xbf16>
    %c16_10 = arith.constant 16 : index
    %c383 = arith.constant 383 : index
    %8 = vector.load %arg7[%c16_10, %c383] : memref<144x384xbf16, #tpu.memory_space<vmem>>, vector<16x1xbf16>
    tpu.vector_store %arg7[%c16_10, %c383], %7 {strides = array<i32>} : memref<144x384xbf16, #tpu.memory_space<vmem>>, vector<16x1xbf16>,
    %c0_11 = arith.constant 0 : index
    %c0_12 = arith.constant 0 : index
    %c2 = arith.constant 2 : index
    %9 = vector.load %arg2[%c0_11, %c0_12, %c2] : memref<1x16x384xbf16, #tpu.memory_space<vmem>>, vector<1x16x382xbf16>
    %10 = vector.shape_cast %9 : vector<1x16x382xbf16> to vector<16x382xbf16>
    %c32 = arith.constant 32 : index
    %c0_13 = arith.constant 0 : index
    %11 = vector.load %arg7[%c32, %c0_13] : memref<144x384xbf16, #tpu.memory_space<vmem>>, vector<16x382xbf16>
    tpu.vector_store %arg7[%c32, %c0_13], %10 {strides = array<i32>} : memref<144x384xbf16, #tpu.memory_space<vmem>>, vector<16x382xbf16>,
    %c0_14 = arith.constant 0 : index
    %c0_15 = arith.constant 0 : index
    %c0_16 = arith.constant 0 : index
    %12 = vector.load %arg3[%c0_14, %c0_15, %c0_16] : memref<1x16x128xbf16, #tpu.memory_space<vmem>>, vector<1x16x2xbf16>
    %13 = vector.shape_cast %12 : vector<1x16x2xbf16> to vector<16x2xbf16>
    %c32_17 = arith.constant 32 : index
    %c382 = arith.constant 382 : index
    %14 = vector.load %arg7[%c32_17, %c382] : memref<144x384xbf16, #tpu.memory_space<vmem>>, vector<16x2xbf16>
    tpu.vector_store %arg7[%c32_17, %c382], %13 {strides = array<i32>} : memref<144x384xbf16, #tpu.memory_space<vmem>>, vector<16x2xbf16>,
    %c0_18 = arith.constant 0 : index
    %c0_19 = arith.constant 0 : index
    %c18 = arith.constant 18 : index
    %15 = vector.load %arg2[%c0_18, %c0_19, %c18] : memref<1x16x384xbf16, #tpu.memory_space<vmem>>, vector<1x16x366xbf16>
    %16 = vector.shape_cast %15 : vector<1x16x366xbf16> to vector<16x366xbf16>
    %c48 = arith.constant 48 : index
    %c0_20 = arith.constant 0 : index
    %17 = vector.load %arg7[%c48, %c0_20] : memref<144x384xbf16, #tpu.memory_space<vmem>>, vector<16x366xbf16>
    tpu.vector_store %arg7[%c48, %c0_20], %16 {strides = array<i32>} : memref<144x384xbf16, #tpu.memory_space<vmem>>, vector<16x366xbf16>,
    %c0_21 = arith.constant 0 : index
    %c0_22 = arith.constant 0 : index
    %c0_23 = arith.constant 0 : index
    %18 = vector.load %arg3[%c0_21, %c0_22, %c0_23] : memref<1x16x128xbf16, #tpu.memory_space<vmem>>, vector<1x16x18xbf16>
    %19 = vector.shape_cast %18 : vector<1x16x18xbf16> to vector<16x18xbf16>
    %c48_24 = arith.constant 48 : index
    %c366 = arith.constant 366 : index
    %20 = vector.load %arg7[%c48_24, %c366] : memref<144x384xbf16, #tpu.memory_space<vmem>>, vector<16x18xbf16>
    tpu.vector_store %arg7[%c48_24, %c366], %19 {strides = array<i32>} : memref<144x384xbf16, #tpu.memory_space<vmem>>, vector<16x18xbf16>,
    %c0_25 = arith.constant 0 : index
    %c0_26 = arith.constant 0 : index
    %c19 = arith.constant 19 : index
    %21 = vector.load %arg2[%c0_25, %c0_26, %c19] : memref<1x16x384xbf16, #tpu.memory_space<vmem>>, vector<1x16x365xbf16>
    %22 = vector.shape_cast %21 : vector<1x16x365xbf16> to vector<16x365xbf16>
    %c64 = arith.constant 64 : index
    %c0_27 = arith.constant 0 : index
    %23 = vector.load %arg7[%c64, %c0_27] : memref<144x384xbf16, #tpu.memory_space<vmem>>, vector<16x365xbf16>
    tpu.vector_store %arg7[%c64, %c0_27], %22 {strides = array<i32>} : memref<144x384xbf16, #tpu.memory_space<vmem>>, vector<16x365xbf16>,
    %c0_28 = arith.constant 0 : index
    %c0_29 = arith.constant 0 : index
    %c0_30 = arith.constant 0 : index
    %24 = vector.load %arg3[%c0_28, %c0_29, %c0_30] : memref<1x16x128xbf16, #tpu.memory_space<vmem>>, vector<1x16x19xbf16>
    %25 = vector.shape_cast %24 : vector<1x16x19xbf16> to vector<16x19xbf16>
    %c64_31 = arith.constant 64 : index
    %c365 = arith.constant 365 : index
    %26 = vector.load %arg7[%c64_31, %c365] : memref<144x384xbf16, #tpu.memory_space<vmem>>, vector<16x19xbf16>
    tpu.vector_store %arg7[%c64_31, %c365], %25 {strides = array<i32>} : memref<144x384xbf16, #tpu.memory_space<vmem>>, vector<16x19xbf16>,
    %c0_32 = arith.constant 0 : index
    %c0_33 = arith.constant 0 : index
    %c20 = arith.constant 20 : index
    %27 = vector.load %arg2[%c0_32, %c0_33, %c20] : memref<1x16x384xbf16, #tpu.memory_space<vmem>>, vector<1x16x364xbf16>
    %28 = vector.shape_cast %27 : vector<1x16x364xbf16> to vector<16x364xbf16>
    %c80 = arith.constant 80 : index
    %c0_34 = arith.constant 0 : index
    %29 = vector.load %arg7[%c80, %c0_34] : memref<144x384xbf16, #tpu.memory_space<vmem>>, vector<16x364xbf16>
    tpu.vector_store %arg7[%c80, %c0_34], %28 {strides = array<i32>} : memref<144x384xbf16, #tpu.memory_space<vmem>>, vector<16x364xbf16>,
    %c0_35 = arith.constant 0 : index
    %c0_36 = arith.constant 0 : index
    %c0_37 = arith.constant 0 : index
    %30 = vector.load %arg3[%c0_35, %c0_36, %c0_37] : memref<1x16x128xbf16, #tpu.memory_space<vmem>>, vector<1x16x20xbf16>
    %31 = vector.shape_cast %30 : vector<1x16x20xbf16> to vector<16x20xbf16>
    %c80_38 = arith.constant 80 : index
    %c364 = arith.constant 364 : index
    %32 = vector.load %arg7[%c80_38, %c364] : memref<144x384xbf16, #tpu.memory_space<vmem>>, vector<16x20xbf16>
    tpu.vector_store %arg7[%c80_38, %c364], %31 {strides = array<i32>} : memref<144x384xbf16, #tpu.memory_space<vmem>>, vector<16x20xbf16>,
    %c0_39 = arith.constant 0 : index
    %c0_40 = arith.constant 0 : index
    %c36 = arith.constant 36 : index
    %33 = vector.load %arg2[%c0_39, %c0_40, %c36] : memref<1x16x384xbf16, #tpu.memory_space<vmem>>, vector<1x16x348xbf16>
    %34 = vector.shape_cast %33 : vector<1x16x348xbf16> to vector<16x348xbf16>
    %c96 = arith.constant 96 : index
    %c0_41 = arith.constant 0 : index
    %35 = vector.load %arg7[%c96, %c0_41] : memref<144x384xbf16, #tpu.memory_space<vmem>>, vector<16x348xbf16>
    tpu.vector_store %arg7[%c96, %c0_41], %34 {strides = array<i32>} : memref<144x384xbf16, #tpu.memory_space<vmem>>, vector<16x348xbf16>,
    %c0_42 = arith.constant 0 : index
    %c0_43 = arith.constant 0 : index
    %c0_44 = arith.constant 0 : index
    %36 = vector.load %arg3[%c0_42, %c0_43, %c0_44] : memref<1x16x128xbf16, #tpu.memory_space<vmem>>, vector<1x16x36xbf16>
    %37 = vector.shape_cast %36 : vector<1x16x36xbf16> to vector<16x36xbf16>
    %c96_45 = arith.constant 96 : index
    %c348 = arith.constant 348 : index
    %38 = vector.load %arg7[%c96_45, %c348] : memref<144x384xbf16, #tpu.memory_space<vmem>>, vector<16x36xbf16>
    tpu.vector_store %arg7[%c96_45, %c348], %37 {strides = array<i32>} : memref<144x384xbf16, #tpu.memory_space<vmem>>, vector<16x36xbf16>,
    %c0_46 = arith.constant 0 : index
    %c0_47 = arith.constant 0 : index
    %c37 = arith.constant 37 : index
    %39 = vector.load %arg2[%c0_46, %c0_47, %c37] : memref<1x16x384xbf16, #tpu.memory_space<vmem>>, vector<1x16x347xbf16>
    %40 = vector.shape_cast %39 : vector<1x16x347xbf16> to vector<16x347xbf16>
    %c112 = arith.constant 112 : index
    %c0_48 = arith.constant 0 : index
    %41 = vector.load %arg7[%c112, %c0_48] : memref<144x384xbf16, #tpu.memory_space<vmem>>, vector<16x347xbf16>
    tpu.vector_store %arg7[%c112, %c0_48], %40 {strides = array<i32>} : memref<144x384xbf16, #tpu.memory_space<vmem>>, vector<16x347xbf16>,
    %c0_49 = arith.constant 0 : index
    %c0_50 = arith.constant 0 : index
    %c0_51 = arith.constant 0 : index
    %42 = vector.load %arg3[%c0_49, %c0_50, %c0_51] : memref<1x16x128xbf16, #tpu.memory_space<vmem>>, vector<1x16x37xbf16>
    %43 = vector.shape_cast %42 : vector<1x16x37xbf16> to vector<16x37xbf16>
    %c112_52 = arith.constant 112 : index
    %c347 = arith.constant 347 : index
    %44 = vector.load %arg7[%c112_52, %c347] : memref<144x384xbf16, #tpu.memory_space<vmem>>, vector<16x37xbf16>
    tpu.vector_store %arg7[%c112_52, %c347], %43 {strides = array<i32>} : memref<144x384xbf16, #tpu.memory_space<vmem>>, vector<16x37xbf16>,
    %c0_53 = arith.constant 0 : index
    %c0_54 = arith.constant 0 : index
    %c38 = arith.constant 38 : index
    %45 = vector.load %arg2[%c0_53, %c0_54, %c38] : memref<1x16x384xbf16, #tpu.memory_space<vmem>>, vector<1x16x346xbf16>
    %46 = vector.shape_cast %45 : vector<1x16x346xbf16> to vector<16x346xbf16>
    %c128 = arith.constant 128 : index
    %c0_55 = arith.constant 0 : index
    %47 = vector.load %arg7[%c128, %c0_55] : memref<144x384xbf16, #tpu.memory_space<vmem>>, vector<16x346xbf16>
    tpu.vector_store %arg7[%c128, %c0_55], %46 {strides = array<i32>} : memref<144x384xbf16, #tpu.memory_space<vmem>>, vector<16x346xbf16>,
    %c0_56 = arith.constant 0 : index
    %c0_57 = arith.constant 0 : index
    %c0_58 = arith.constant 0 : index
    %48 = vector.load %arg3[%c0_56, %c0_57, %c0_58] : memref<1x16x128xbf16, #tpu.memory_space<vmem>>, vector<1x16x38xbf16>
    %49 = vector.shape_cast %48 : vector<1x16x38xbf16> to vector<16x38xbf16>
    %c128_59 = arith.constant 128 : index
    %c346 = arith.constant 346 : index
    %50 = vector.load %arg7[%c128_59, %c346] : memref<144x384xbf16, #tpu.memory_space<vmem>>, vector<16x38xbf16>
    tpu.vector_store %arg7[%c128_59, %c346], %49 {strides = array<i32>} : memref<144x384xbf16, #tpu.memory_space<vmem>>, vector<16x38xbf16>,
    %c0_60 = arith.constant 0 : index
    %c0_61 = arith.constant 0 : index
    %51 = vector.load %arg4[%c0_60, %c0_61] : memref<8x144xbf16, #tpu.memory_space<vmem>>, vector<8x144xbf16>
    %c0_62 = arith.constant 0 : index
    %c0_63 = arith.constant 0 : index
    %52 = vector.load %arg7[%c0_62, %c0_63] : memref<144x384xbf16, #tpu.memory_space<vmem>>, vector<144x384xbf16>
    %cst = arith.constant dense<0.000000e+00> : vector<8x384xf32>
    %53 = tpu.matmul %51, %52, %cst {dimension_numbers = #tpu.dot_dimension_numbers<[1], [0], [0], [1], [0, 0, 1, 1], [], []>} : vector<8x144xbf16>, vector<144x384xbf16>, vector<8x384xf32> -> vector<8x384xf32>
    %c0_64 = arith.constant 0 : index
    %c0_65 = arith.constant 0 : index
    %54 = vector.load %arg5[%c0_64, %c0_65] : memref<8x1xf32, #tpu.memory_space<vmem>>, vector<8x1xf32>
    %55 = vector.broadcast %54 : vector<8x1xf32> to vector<8x384xf32>
    %56 = arith.addf %53, %55 : vector<8x384xf32>
    %c0_66 = arith.constant 0 : index
    %c0_67 = arith.constant 0 : index
    %c0_68 = arith.constant 0 : index
    %57 = vector.load %arg6[%c0_66, %c0_67, %c0_68] : memref<1x8x384xf32, #tpu.memory_space<vmem>>, vector<1x8x384xf32>
    %58 = vector.shape_cast %57 : vector<1x8x384xf32> to vector<8x384xf32>
    %59 = vector.shape_cast %56 : vector<8x384xf32> to vector<1x8x384xf32>
    tpu.vector_store %arg6[%c0_66, %c0_67, %c0_68], %59 {strides = array<i32>} : memref<1x8x384xf32, #tpu.memory_space<vmem>>, vector<1x8x384xf32>,
    return
  }
  func.func @transform_0(%arg0: i32, %arg1: i32) -> (i32, i32, i32) {
    %c0_i32 = arith.constant 0 : i32
    %c0_i32_0 = arith.constant 0 : i32
    return %arg0, %c0_i32, %arg1 : i32, i32, i32
  }
  func.func @transform_1(%arg0: i32, %arg1: i32) -> (i32, i32, i32) {
    %c1_i32 = arith.constant 1 : i32
    %0 = arith.addi %arg1, %c1_i32 : i32
    %c3_i32 = arith.constant 3 : i32
    %1 = arith.muli %0, %c3_i32 : i32
    %c0_i32 = arith.constant 0 : i32
    %c0_i32_0 = arith.constant 0 : i32
    return %arg0, %c0_i32, %1 : i32, i32, i32
  }
  func.func @transform_2(%arg0: i32, %arg1: i32) -> (i32, i32) {
    %c0_i32 = arith.constant 0 : i32
    %c0_i32_0 = arith.constant 0 : i32
    %c0_i32_1 = arith.constant 0 : i32
    return %c0_i32, %c0_i32_0 : i32, i32
  }
  func.func @transform_3(%arg0: i32, %arg1: i32) -> (i32, i32) {
    %c0_i32 = arith.constant 0 : i32
    %c0_i32_0 = arith.constant 0 : i32
    %c0_i32_1 = arith.constant 0 : i32
    return %c0_i32, %c0_i32_0 : i32, i32
  }
  func.func @transform_4(%arg0: i32, %arg1: i32) -> (i32, i32, i32) {
    %c0_i32 = arith.constant 0 : i32
    %c0_i32_0 = arith.constant 0 : i32
    return %arg0, %c0_i32, %arg1 : i32, i32, i32
  }
}

</mosaic_0001>

<llo_original>
// kernel: conv2d_same_padding.1
$region0: #{conv2d_same_padding.1}
  #allocation0 [shape = 'u32[]', space=smem, size = 0x4, offset = 0x4, fixed_abs, tag = 'smem constant byte address 0x4 - core index']
  #allocation1 [shape = 'u32[72,128]{1,0:T(1,128)}', space=vmem, size = 0x9000, scoped, tag = 'internal scratch']
  #allocation2 [shape = 'bf16[144,384]{1,0:T(8,128)(2,1)}', space=vmem, size = 0x1b000, scoped, tag = 'scratch operand']
  %s0 = inlined_call_operand.vmem [shape: bf16[2,16,512], index: 0, kind: input, shape index: {}, may-alias: {0,1}]
  %s1 = inlined_call_operand.vmem [shape: bf16[2,16,512], index: 1, kind: input, shape index: {}, may-alias: {0,1}]
  %s2 = inlined_call_operand.vmem [shape: bf16[8,144], index: 2, kind: input, shape index: {}]
  %s3 = inlined_call_operand.vmem [shape: f32[8,1], index: 3, kind: input, shape index: {}]
  %s4 = inlined_call_operand.vmem [shape: f32[2,8,384], index: 4, kind: output, shape index: {}]
  %s5 = sld [smem:[#allocation0]]
  $region156: #{conv2d_same_padding.1} parent=0
    _
  %s7 = ssub.s32 1, %s5
  %s8 = scalar_select 0, %s7, %s5
  $region1: #{conv2d_same_padding.1} parent=0
    #allocation3 [shape = 'u8[24576]{0}', space=vmem, size = 0x6000, scoped, tag = 'input window, operand 0']
    #allocation4 [shape = 'u8[8192]{0}', space=vmem, size = 0x2000, scoped, tag = 'input window, operand 1']
    loop: start=0, step=1, limit=4
    $region2: #{conv2d_same_padding.1} parent=1 // loop_pre_header
      _
    $region3: #{conv2d_same_padding.1} parent=1 // loop_header
      %s10 = sphi 0, %s14
      %p11 = scmp.ge.s32.totalorder %s10, 4
      %s17 = sphi 0, %s29
      %s18 = sphi 0, %s25
      %s19 = sphi 0, %s17
      %s20 = sphi 0, %s18
      %s21 = sphi 0, %s19
      %s22 = sphi 0, %s20
      %s34 = sphi 0, %s36
      %s37 = sphi 0, %s34
      %s38 = sphi 0, %s37
      %s54 = sphi 0, %s38
      %s66 = sphi 0, %s68
      %s69 = sphi 0, %s66
      %s70 = sphi 0, %s69
      %s86 = sphi 0, %s70
      %s90 = sphi 0, %s90
      %s92 = sphi 0, %s90
      %s93 = sphi 0, %s92
      %s107 = sphi 0, %s93
      %s111 = sphi 0, %s111
      %s113 = sphi 0, %s111
      %s114 = sphi 0, %s113
      %s128 = sphi 0, %s114
      %s136 = sphi 0, %s138
      %s139 = sphi 0, %s136
      %s140 = sphi 0, %s139
      %s156 = sphi 0, %s140
    $region4: #{conv2d_same_padding.1} parent=1 // loop_header_branch
      %13 = sbr.rel (%p11) target = $region8
    $region5: #{conv2d_same_padding.1} parent=1 // loop_body
      %s15 = ssub.s32 %s10, 1
      %s16 = ssub.s32 %s10, 2
      %s23 = sadd.s32 1, %s18
      %p24 = scmp.ge.s32.totalorder %s23, 1
      %s25 = scalar_select %p24, 0, %s23
      %s26 = sadd.s32 1, %s17
      %s27 = scalar_select %p24, %s26, %s17
      %p28 = scmp.ge.s32.totalorder %s27, 2
      %s29 = scalar_select %p28, 0, %s27
      %s30 = ssub.s32 %s17, %s29
      %s31 = ssub.s32 %s18, %s25
      %s32 = sor.u32 %s30, %s31
      %p33 = scmp.eq.s32.totalorder %s32, 0
      %s35 = sadd.s32 %s34, 1
      %s36 = scalar_select %p33, %s34, %s35
      %p39 = pneg %p33
      %p40 = scmp.eq.s32.totalorder %s10, 1
      %p41 = por %p39, %p40
      %p42 = scmp.ne.s32.totalorder %s34, %s37
      %p43 = scmp.eq.s32.totalorder %s10, 0
      %p44 = por %p42, %p43
      %p45 = scmp.ne.s32.totalorder %s34, %s37
      %p46 = scmp.eq.s32.totalorder %s15, 1
      %p47 = por %p45, %p46
      %p48 = scmp.ne.s32.totalorder %s37, %s38
      %p49 = scmp.eq.s32.totalorder %s15, 0
      %p50 = por %p48, %p49
      %p51 = scmp.ne.s32.totalorder %s37, %s38
      %p52 = scmp.eq.s32.totalorder %s16, 1
      %p53 = por %p51, %p52
      %p55 = scmp.ne.s32.totalorder %s38, %s54
      %p56 = scmp.eq.s32.totalorder %s16, 0
      %p57 = por %p55, %p56
      %s58 = sadd.s32 %s18, 1
      %s59 = smul.u32 %s58, 3
      %s60 = sadd.s32 %s25, 1
      %s61 = smul.u32 %s60, 3
      %s62 = ssub.s32 %s17, %s29
      %s63 = ssub.s32 %s59, %s61
      %s64 = sor.u32 %s62, %s63
      %p65 = scmp.eq.s32.totalorder %s64, 0
      %s67 = sadd.s32 %s66, 1
      %s68 = scalar_select %p65, %s66, %s67
      %p71 = pneg %p65
      %p72 = scmp.eq.s32.totalorder %s10, 1
      %p73 = por %p71, %p72
      %p74 = scmp.ne.s32.totalorder %s66, %s69
      %p75 = scmp.eq.s32.totalorder %s10, 0
      %p76 = por %p74, %p75
      %p77 = scmp.ne.s32.totalorder %s66, %s69
      %p78 = scmp.eq.s32.totalorder %s15, 1
      %p79 = por %p77, %p78
      %p80 = scmp.ne.s32.totalorder %s69, %s70
      %p81 = scmp.eq.s32.totalorder %s15, 0
      %p82 = por %p80, %p81
      %p83 = scmp.ne.s32.totalorder %s69, %s70
      %p84 = scmp.eq.s32.totalorder %s16, 1
      %p85 = por %p83, %p84
      %p87 = scmp.ne.s32.totalorder %s70, %s86
      %p88 = scmp.eq.s32.totalorder %s16, 0
      %p89 = por %p87, %p88
      %s91 = sadd.s32 %s90, 1
      %p94 = scmp.eq.s32.totalorder %s10, 1
      %p95 = scmp.ne.s32.totalorder %s90, %s92
      %p96 = scmp.eq.s32.totalorder %s10, 0
      %p97 = por %p95, %p96
      %p98 = scmp.ne.s32.totalorder %s90, %s92
      %p99 = scmp.eq.s32.totalorder %s15, 1
      %p100 = por %p98, %p99
      %p101 = scmp.ne.s32.totalorder %s92, %s93
      %p102 = scmp.eq.s32.totalorder %s15, 0
      %p103 = por %p101, %p102
      %p104 = scmp.ne.s32.totalorder %s92, %s93
      %p105 = scmp.eq.s32.totalorder %s16, 1
      %p106 = por %p104, %p105
      %p108 = scmp.ne.s32.totalorder %s93, %s107
      %p109 = scmp.eq.s32.totalorder %s16, 0
      %p110 = por %p108, %p109
      %s112 = sadd.s32 %s111, 1
      %p115 = scmp.eq.s32.totalorder %s10, 1
      %p116 = scmp.ne.s32.totalorder %s111, %s113
      %p117 = scmp.eq.s32.totalorder %s10, 0
      %p118 = por %p116, %p117
      %p119 = scmp.ne.s32.totalorder %s111, %s113
      %p120 = scmp.eq.s32.totalorder %s15, 1
      %p121 = por %p119, %p120
      %p122 = scmp.ne.s32.totalorder %s113, %s114
      %p123 = scmp.eq.s32.totalorder %s15, 0
      %p124 = por %p122, %p123
      %p125 = scmp.ne.s32.totalorder %s113, %s114
      %p126 = scmp.eq.s32.totalorder %s16, 1
      %p127 = por %p125, %p126
      %p129 = scmp.ne.s32.totalorder %s114, %s128
      %p130 = scmp.eq.s32.totalorder %s16, 0
      %p131 = por %p129, %p130
      %s132 = ssub.s32 %s17, %s29
      %s133 = ssub.s32 %s18, %s25
      %s134 = sor.u32 %s132, %s133
      %p135 = scmp.eq.s32.totalorder %s134, 0
      %s137 = sadd.s32 %s136, 1
      %s138 = scalar_select %p135, %s136, %s137
      %p141 = pneg %p135
      %p142 = scmp.eq.s32.totalorder %s10, 1
      %p143 = por %p141, %p142
      %p144 = scmp.ne.s32.totalorder %s136, %s139
      %p145 = scmp.eq.s32.totalorder %s10, 0
      %p146 = por %p144, %p145
      %p147 = scmp.ne.s32.totalorder %s136, %s139
      %p148 = scmp.eq.s32.totalorder %s15, 1
      %p149 = por %p147, %p148
      %p150 = scmp.ne.s32.totalorder %s139, %s140
      %p151 = scmp.eq.s32.totalorder %s15, 0
      %p152 = por %p150, %p151
      %p153 = scmp.ne.s32.totalorder %s139, %s140
      %p154 = scmp.eq.s32.totalorder %s16, 1
      %p155 = por %p153, %p154
      %p157 = scmp.ne.s32.totalorder %s140, %s156
      %p158 = scmp.eq.s32.totalorder %s16, 0
      %p159 = por %p157, %p158
      %p160 = scmp.le.s32.totalorder 1, %s10
      %p161 = scmp.lt.s32.totalorder %s10, 3
      %p162 = pnand %p160, %p161
      %p163 = pneg %p162
      // Predicated region
      $region9: #{conv2d_same_padding.1} parent=5 // pred_check
        _
      $region10: #{conv2d_same_padding.1} parent=5 // pred_check_branch
        %165 = sbr.rel (%p162) target = $region12
      $region11: #{conv2d_same_padding.1} parent=5 // pred_region
        %s166 = ssub.s32 %s10, 1
        // Predicated region
        $region13: #{conv2d_same_padding.1} parent=11 // pred_check
          %p167 = pneg %p103
        $region14: #{conv2d_same_padding.1} parent=11 // pred_check_branch
          %169 = sbr.rel (%p167) target = $region16
        $region15: #{conv2d_same_padding.1} parent=11 // pred_region
          _
        $region16: #{conv2d_same_padding.1} parent=11 // pred_fallthru
          _
        // Predicated region
        $region17: #{conv2d_same_padding.1} parent=11 // pred_check
          %p170 = pneg %p124
        $region18: #{conv2d_same_padding.1} parent=11 // pred_check_branch
          %172 = sbr.rel (%p170) target = $region20
        $region19: #{conv2d_same_padding.1} parent=11 // pred_region
          _
        $region20: #{conv2d_same_padding.1} parent=11 // pred_fallthru
          _
      $region12: #{conv2d_same_padding.1} parent=5 // pred_fallthru
        _
      %p173 = scmp.lt.s32.totalorder %s10, 2
      // Predicated region
      $region21: #{conv2d_same_padding.1} parent=5 // pred_check
        %p174 = pneg %p173
      $region22: #{conv2d_same_padding.1} parent=5 // pred_check_branch
        %176 = sbr.rel (%p174) target = $region24
      $region23: #{conv2d_same_padding.1} parent=5 // pred_region
        // Predicated region
        $region25: #{conv2d_same_padding.1} parent=23 // pred_check
          %p177 = pneg %p44
        $region26: #{conv2d_same_padding.1} parent=23 // pred_check_branch
          %179 = sbr.rel (%p177) target = $region28
        $region27: #{conv2d_same_padding.1} parent=23 // pred_region
          %s180 = sand.u32 %s34, 1
          %s181 = sand.u32 %s34, 1
          %s182 = smul.addr %s181, 24
          %s183 = scalar_lea.vmem [#allocation3], %s182
          %s184 = smul.u32 3, %s18
          %s185 = ssub.s32 4, %s184
          %p186 = scmp.lt.s32.totalorder %s185, 3
          %s187 = scalar_select %p186, %s185, 3
          %s188 = smul.u32 8, %s187
          %p189 = scmp.ne.s32.totalorder 0, %s188
          %s190 = smul.addr %s17, 8
          %s191 = sadd.s32 %s184, %s190
          %s192 = smul.addr %s191, 4
          %s193 = scalar_lea.vmem %s0, %s192
          %s194 = smul.u32 %s187, 4
          // Predicated region
          $region29: #{conv2d_same_padding.1} parent=27 // pred_check
            %p195 = pneg %p189
          $region30: #{conv2d_same_padding.1} parent=27 // pred_check_branch
            %197 = sbr.rel (%p195) target = $region32
          $region31: #{conv2d_same_padding.1} parent=27 // pred_region
            %p198 = scmp.lt.u32.totalorder %s194, 8
            %p199 = pneg %p198
            // Predicated region
            $region33: #{conv2d_same_padding.1} parent=31 // pred_check
              _
            $region34: #{conv2d_same_padding.1} parent=31 // pred_check_branch
              %201 = sbr.rel (%p198) target = $region36
            $region35: #{conv2d_same_padding.1} parent=31 // pred_region
              %s219 = sand.u32 %s194, 7
              %p220 = scmp.eq.s32.totalorder %s219, 0
              // Predicated region
              $region48: #{conv2d_same_padding.1} parent=35 // pred_check
                %p221 = pneg %p220
              $region49: #{conv2d_same_padding.1} parent=35 // pred_check_branch
                %223 = sbr.rel (%p221) target = $region51
              $region50: #{conv2d_same_padding.1} parent=35 // pred_region
                %s224 = sshrl.u32 %s194, 3
                %s225 = sshrl.u32 %s224, 4
                // While loop
                $region52: #{conv2d_same_padding.1} parent=50 // loop_pre_header
                  _
                $region53: #{conv2d_same_padding.1} parent=50 // loop_header
                  %s227 = sphi 0, %s229
                  %p228 = scmp.ge.s32.totalorder %s227, %s225
                  %s232 = sphi 0, %s301
                  %s233 = sphi %s193, %s304
                  %s234 = sphi %s183, %s305
                $region54: #{conv2d_same_padding.1} parent=50 // loop_header_branch
                  %231 = sbr.rel (%p228) target = $region58
                $region55: #{conv2d_same_padding.1} parent=50 // loop_body
                  %v235 = vld [vmem:[%s233] sm:$0xff]
                  %236 = vst [vmem:[%s234] sm:$0xff] %v235
                  %v237 = vld [vmem:[%s233 + $0x8] sm:$0xff]
                  %238 = vst [vmem:[%s234 + $0x8] sm:$0xff] %v237
                  %v239 = vld [vmem:[%s233 + $0x10] sm:$0xff]
                  %240 = vst [vmem:[%s234 + $0x10] sm:$0xff] %v239
                  %v241 = vld [vmem:[%s233 + $0x18] sm:$0xff]
                  %242 = vst [vmem:[%s234 + $0x18] sm:$0xff] %v241
                  %v243 = vld [vmem:[%s233 + $0x20] sm:$0xff]
                  %244 = vst [vmem:[%s234 + $0x20] sm:$0xff] %v243
                  %v245 = vld [vmem:[%s233 + $0x28] sm:$0xff]
                  %246 = vst [vmem:[%s234 + $0x28] sm:$0xff] %v245
                  %v247 = vld [vmem:[%s233 + $0x30] sm:$0xff]
                  %248 = vst [vmem:[%s234 + $0x30] sm:$0xff] %v247
                  %v249 = vld [vmem:[%s233 + $0x38] sm:$0xff]
                  %250 = vst [vmem:[%s234 + $0x38] sm:$0xff] %v249
                  %v251 = vld [vmem:[%s233 + $0x40] sm:$0xff]
                  %252 = vst [vmem:[%s234 + $0x40] sm:$0xff] %v251
                  %v253 = vld [vmem:[%s233 + $0x48] sm:$0xff]
                  %254 = vst [vmem:[%s234 + $0x48] sm:$0xff] %v253
                  %v255 = vld [vmem:[%s233 + $0x50] sm:$0xff]
                  %256 = vst [vmem:[%s234 + $0x50] sm:$0xff] %v255
                  %v257 = vld [vmem:[%s233 + $0x58] sm:$0xff]
                  %258 = vst [vmem:[%s234 + $0x58] sm:$0xff] %v257
                  %v259 = vld [vmem:[%s233 + $0x60] sm:$0xff]
                  %260 = vst [vmem:[%s234 + $0x60] sm:$0xff] %v259
                  %v261 = vld [vmem:[%s233 + $0x68] sm:$0xff]
                  %262 = vst [vmem:[%s234 + $0x68] sm:$0xff] %v261
                  %v263 = vld [vmem:[%s233 + $0x70] sm:$0xff]
                  %264 = vst [vmem:[%s234 + $0x70] sm:$0xff] %v263
                  %v265 = vld [vmem:[%s233 + $0x78] sm:$0xff]
                  %266 = vst [vmem:[%s234 + $0x78] sm:$0xff] %v265
                  %v267 = vld [vmem:[%s233 + $0x10] sm:$0xff]
                  %268 = vst [vmem:[%s234 + $0xc] sm:$0xff] %v267
                  %v269 = vld [vmem:[%s233 + $0x18] sm:$0xff]
                  %270 = vst [vmem:[%s234 + $0x14] sm:$0xff] %v269
                  %v271 = vld [vmem:[%s233 + $0x20] sm:$0xff]
                  %272 = vst [vmem:[%s234 + $0x1c] sm:$0xff] %v271
                  %v273 = vld [vmem:[%s233 + $0x28] sm:$0xff]
                  %274 = vst [vmem:[%s234 + $0x24] sm:$0xff] %v273
                  %v275 = vld [vmem:[%s233 + $0x30] sm:$0xff]
                  %276 = vst [vmem:[%s234 + $0x2c] sm:$0xff] %v275
                  %v277 = vld [vmem:[%s233 + $0x38] sm:$0xff]
                  %278 = vst [vmem:[%s234 + $0x34] sm:$0xff] %v277
                  %v279 = vld [vmem:[%s233 + $0x40] sm:$0xff]
                  %280 = vst [vmem:[%s234 + $0x3c] sm:$0xff] %v279
                  %v281 = vld [vmem:[%s233 + $0x48] sm:$0xff]
                  %282 = vst [vmem:[%s234 + $0x44] sm:$0xff] %v281
                  %v283 = vld [vmem:[%s233 + $0x50] sm:$0xff]
                  %284 = vst [vmem:[%s234 + $0x4c] sm:$0xff] %v283
                  %v285 = vld [vmem:[%s233 + $0x58] sm:$0xff]
                  %286 = vst [vmem:[%s234 + $0x54] sm:$0xff] %v285
                  %v287 = vld [vmem:[%s233 + $0x60] sm:$0xff]
                  %288 = vst [vmem:[%s234 + $0x5c] sm:$0xff] %v287
                  %v289 = vld [vmem:[%s233 + $0x68] sm:$0xff]
                  %290 = vst [vmem:[%s234 + $0x64] sm:$0xff] %v289
                  %v291 = vld [vmem:[%s233 + $0x70] sm:$0xff]
                  %292 = vst [vmem:[%s234 + $0x6c] sm:$0xff] %v291
                  %v293 = vld [vmem:[%s233 + $0x78] sm:$0xff]
                  %294 = vst [vmem:[%s234 + $0x74] sm:$0xff] %v293
                  %v295 = vld [vmem:[%s233 + $0x80] sm:$0xff]
                  %296 = vst [vmem:[%s234 + $0x7c] sm:$0xff] %v295
                  %v297 = vld [vmem:[%s233 + $0x88] sm:$0xff]
                  %298 = vst [vmem:[%s234 + $0x84] sm:$0xff] %v297
                  %s299 = sadd.s32 1, %s232
                  %p300 = scmp.ge.s32.totalorder %s299, %s225
                  %s301 = scalar_select %p300, 0, %s299
                  %s302 = smul.u32 %s301, 128
                  %s303 = smul.u32 %s301, 128
                  %s304 = scalar_lea.vmem %s193, %s302
                  %s305 = scalar_lea.vmem %s183, %s303 [#allocation3]
                $region56: #{conv2d_same_padding.1} parent=50 // loop_footer
                  %s229 = sadd.s32 %s227, 1
                $region57: #{conv2d_same_padding.1} parent=50 // loop_footer_branch
                  %226 = sbr.rel target = $region53
                $region58: #{conv2d_same_padding.1} parent=50 // loop_exit
                  _
                %s306 = sshrl.u32 %s224, 4
                %s307 = sand.u32 %s224, 15
                %s308 = smul.u32 %s306, 16
                %s309 = smul.u32 8, %s308
                %s310 = scalar_lea.vmem %s193, %s309
                %s311 = smul.u32 8, %s308
                %s312 = scalar_lea.vmem %s183, %s311 [#allocation3]
                // While loop
                $region59: #{conv2d_same_padding.1} parent=50 // loop_pre_header
                  _
                $region60: #{conv2d_same_padding.1} parent=50 // loop_header
                  %s314 = sphi 0, %s316
                  %p315 = scmp.ge.s32.totalorder %s314, %s307
                  %s319 = sphi 0, %s328
                  %s320 = sphi %s310, %s331
                  %s321 = sphi %s312, %s332
                $region61: #{conv2d_same_padding.1} parent=50 // loop_header_branch
                  %318 = sbr.rel (%p315) target = $region65
                $region62: #{conv2d_same_padding.1} parent=50 // loop_body
                  %v322 = vld [vmem:[%s320] sm:$0xff]
                  %323 = vst [vmem:[%s321] sm:$0xff] %v322
                  %v324 = vld [vmem:[%s320 + $0x10] sm:$0xff]
                  %325 = vst [vmem:[%s321 + $0xc] sm:$0xff] %v324
                  %s326 = sadd.s32 1, %s319
                  %p327 = scmp.ge.s32.totalorder %s326, %s307
                  %s328 = scalar_select %p327, 0, %s326
                  %s329 = smul.u32 %s328, 8
                  %s330 = smul.u32 %s328, 8
                  %s331 = scalar_lea.vmem %s310, %s329
                  %s332 = scalar_lea.vmem %s312, %s330 [#allocation3]
                $region63: #{conv2d_same_padding.1} parent=50 // loop_footer
                  %s316 = sadd.s32 %s314, 1
                $region64: #{conv2d_same_padding.1} parent=50 // loop_footer_branch
                  %313 = sbr.rel target = $region60
                $region65: #{conv2d_same_padding.1} parent=50 // loop_exit
                  _
              $region51: #{conv2d_same_padding.1} parent=35 // pred_fallthru
                _
              %p333 = pneg %p220
              // Predicated region
              $region66: #{conv2d_same_padding.1} parent=35 // pred_check
                _
              $region67: #{conv2d_same_padding.1} parent=35 // pred_check_branch
                %335 = sbr.rel (%p220) target = $region69
              $region68: #{conv2d_same_padding.1} parent=35 // pred_region
                %s336 = sand.u32 %s194, 7
                %s337 = ssub.s32 %s194, %s336
                %s338 = scalar_lea.vmem %s193, %s337
                %s339 = ssub.s32 %s194, %s336
                %s340 = scalar_lea.vmem %s183, %s339 [#allocation3]
                %s341 = sshrl.u32 %s194, 3
                %s342 = sshrl.u32 %s341, 4
                // While loop
                $region70: #{conv2d_same_padding.1} parent=68 // loop_pre_header
                  _
                $region71: #{conv2d_same_padding.1} parent=68 // loop_header
                  %s344 = sphi 0, %s346
                  %p345 = scmp.ge.s32.totalorder %s344, %s342
                  %s349 = sphi 0, %s418
                  %s350 = sphi %s193, %s421
                  %s351 = sphi %s183, %s422
                $region72: #{conv2d_same_padding.1} parent=68 // loop_header_branch
                  %348 = sbr.rel (%p345) target = $region76
                $region73: #{conv2d_same_padding.1} parent=68 // loop_body
                  %v352 = vld [vmem:[%s350] sm:$0xff]
                  %353 = vst [vmem:[%s351] sm:$0xff] %v352
                  %v354 = vld [vmem:[%s350 + $0x8] sm:$0xff]
                  %355 = vst [vmem:[%s351 + $0x8] sm:$0xff] %v354
                  %v356 = vld [vmem:[%s350 + $0x10] sm:$0xff]
                  %357 = vst [vmem:[%s351 + $0x10] sm:$0xff] %v356
                  %v358 = vld [vmem:[%s350 + $0x18] sm:$0xff]
                  %359 = vst [vmem:[%s351 + $0x18] sm:$0xff] %v358
                  %v360 = vld [vmem:[%s350 + $0x20] sm:$0xff]
                  %361 = vst [vmem:[%s351 + $0x20] sm:$0xff] %v360
                  %v362 = vld [vmem:[%s350 + $0x28] sm:$0xff]
                  %363 = vst [vmem:[%s351 + $0x28] sm:$0xff] %v362
                  %v364 = vld [vmem:[%s350 + $0x30] sm:$0xff]
                  %365 = vst [vmem:[%s351 + $0x30] sm:$0xff] %v364
                  %v366 = vld [vmem:[%s350 + $0x38] sm:$0xff]
                  %367 = vst [vmem:[%s351 + $0x38] sm:$0xff] %v366
                  %v368 = vld [vmem:[%s350 + $0x40] sm:$0xff]
                  %369 = vst [vmem:[%s351 + $0x40] sm:$0xff] %v368
                  %v370 = vld [vmem:[%s350 + $0x48] sm:$0xff]
                  %371 = vst [vmem:[%s351 + $0x48] sm:$0xff] %v370
                  %v372 = vld [vmem:[%s350 + $0x50] sm:$0xff]
                  %373 = vst [vmem:[%s351 + $0x50] sm:$0xff] %v372
                  %v374 = vld [vmem:[%s350 + $0x58] sm:$0xff]
                  %375 = vst [vmem:[%s351 + $0x58] sm:$0xff] %v374
                  %v376 = vld [vmem:[%s350 + $0x60] sm:$0xff]
                  %377 = vst [vmem:[%s351 + $0x60] sm:$0xff] %v376
                  %v378 = vld [vmem:[%s350 + $0x68] sm:$0xff]
                  %379 = vst [vmem:[%s351 + $0x68] sm:$0xff] %v378
                  %v380 = vld [vmem:[%s350 + $0x70] sm:$0xff]
                  %381 = vst [vmem:[%s351 + $0x70] sm:$0xff] %v380
                  %v382 = vld [vmem:[%s350 + $0x78] sm:$0xff]
                  %383 = vst [vmem:[%s351 + $0x78] sm:$0xff] %v382
                  %v384 = vld [vmem:[%s350 + $0x10] sm:$0xff]
                  %385 = vst [vmem:[%s351 + $0xc] sm:$0xff] %v384
                  %v386 = vld [vmem:[%s350 + $0x18] sm:$0xff]
                  %387 = vst [vmem:[%s351 + $0x14] sm:$0xff] %v386
                  %v388 = vld [vmem:[%s350 + $0x20] sm:$0xff]
                  %389 = vst [vmem:[%s351 + $0x1c] sm:$0xff] %v388
                  %v390 = vld [vmem:[%s350 + $0x28] sm:$0xff]
                  %391 = vst [vmem:[%s351 + $0x24] sm:$0xff] %v390
                  %v392 = vld [vmem:[%s350 + $0x30] sm:$0xff]
                  %393 = vst [vmem:[%s351 + $0x2c] sm:$0xff] %v392
                  %v394 = vld [vmem:[%s350 + $0x38] sm:$0xff]
                  %395 = vst [vmem:[%s351 + $0x34] sm:$0xff] %v394
                  %v396 = vld [vmem:[%s350 + $0x40] sm:$0xff]
                  %397 = vst [vmem:[%s351 + $0x3c] sm:$0xff] %v396
                  %v398 = vld [vmem:[%s350 + $0x48] sm:$0xff]
                  %399 = vst [vmem:[%s351 + $0x44] sm:$0xff] %v398
                  %v400 = vld [vmem:[%s350 + $0x50] sm:$0xff]
                  %401 = vst [vmem:[%s351 + $0x4c] sm:$0xff] %v400
                  %v402 = vld [vmem:[%s350 + $0x58] sm:$0xff]
                  %403 = vst [vmem:[%s351 + $0x54] sm:$0xff] %v402
                  %v404 = vld [vmem:[%s350 + $0x60] sm:$0xff]
                  %405 = vst [vmem:[%s351 + $0x5c] sm:$0xff] %v404
                  %v406 = vld [vmem:[%s350 + $0x68] sm:$0xff]
                  %407 = vst [vmem:[%s351 + $0x64] sm:$0xff] %v406
                  %v408 = vld [vmem:[%s350 + $0x70] sm:$0xff]
                  %409 = vst [vmem:[%s351 + $0x6c] sm:$0xff] %v408
                  %v410 = vld [vmem:[%s350 + $0x78] sm:$0xff]
                  %411 = vst [vmem:[%s351 + $0x74] sm:$0xff] %v410
                  %v412 = vld [vmem:[%s350 + $0x80] sm:$0xff]
                  %413 = vst [vmem:[%s351 + $0x7c] sm:$0xff] %v412
                  %v414 = vld [vmem:[%s350 + $0x88] sm:$0xff]
                  %415 = vst [vmem:[%s351 + $0x84] sm:$0xff] %v414
                  %s416 = sadd.s32 1, %s349
                  %p417 = scmp.ge.s32.totalorder %s416, %s342
                  %s418 = scalar_select %p417, 0, %s416
                  %s419 = smul.u32 %s418, 128
                  %s420 = smul.u32 %s418, 128
                  %s421 = scalar_lea.vmem %s193, %s419
                  %s422 = scalar_lea.vmem %s183, %s420 [#allocation3]
                $region74: #{conv2d_same_padding.1} parent=68 // loop_footer
                  %s346 = sadd.s32 %s344, 1
                $region75: #{conv2d_same_padding.1} parent=68 // loop_footer_branch
                  %343 = sbr.rel target = $region71
                $region76: #{conv2d_same_padding.1} parent=68 // loop_exit
                  _
                %s423 = sshrl.u32 %s341, 4
                %s424 = sand.u32 %s341, 15
                %s425 = smul.u32 %s423, 16
                %s426 = smul.u32 8, %s425
                %s427 = scalar_lea.vmem %s193, %s426
                %s428 = smul.u32 8, %s425
                %s429 = scalar_lea.vmem %s183, %s428 [#allocation3]
                // While loop
                $region77: #{conv2d_same_padding.1} parent=68 // loop_pre_header
                  _
                $region78: #{conv2d_same_padding.1} parent=68 // loop_header
                  %s431 = sphi 0, %s433
                  %p432 = scmp.ge.s32.totalorder %s431, %s424
                  %s436 = sphi 0, %s445
                  %s437 = sphi %s427, %s448
                  %s438 = sphi %s429, %s449
                $region79: #{conv2d_same_padding.1} parent=68 // loop_header_branch
                  %435 = sbr.rel (%p432) target = $region83
                $region80: #{conv2d_same_padding.1} parent=68 // loop_body
                  %v439 = vld [vmem:[%s437] sm:$0xff]
                  %440 = vst [vmem:[%s438] sm:$0xff] %v439
                  %v441 = vld [vmem:[%s437 + $0x10] sm:$0xff]
                  %442 = vst [vmem:[%s438 + $0xc] sm:$0xff] %v441
                  %s443 = sadd.s32 1, %s436
                  %p444 = scmp.ge.s32.totalorder %s443, %s424
                  %s445 = scalar_select %p444, 0, %s443
                  %s446 = smul.u32 %s445, 8
                  %s447 = smul.u32 %s445, 8
                  %s448 = scalar_lea.vmem %s427, %s446
                  %s449 = scalar_lea.vmem %s429, %s447 [#allocation3]
                $region81: #{conv2d_same_padding.1} parent=68 // loop_footer
                  %s433 = sadd.s32 %s431, 1
                $region82: #{conv2d_same_padding.1} parent=68 // loop_footer_branch
                  %430 = sbr.rel target = $region78
                $region83: #{conv2d_same_padding.1} parent=68 // loop_exit
                  _
                %s450 = sshll.u32 1, %s336
                %s451 = ssub.s32 %s450, 1
                loop: start=0, step=1, limit=1
                $region84: #{conv2d_same_padding.1} parent=68 // loop_pre_header
                  _
                $region85: #{conv2d_same_padding.1} parent=68 // loop_header
                  %s453 = sphi 0, %s457
                  %p454 = scmp.ge.s32.totalorder %s453, 1
                  %s458 = sphi %s338, %s338
                  %s459 = sphi %s340, %s340
                $region86: #{conv2d_same_padding.1} parent=68 // loop_header_branch
                  %456 = sbr.rel (%p454) target = $region90
                $region87: #{conv2d_same_padding.1} parent=68 // loop_body
                  %v460 = vld [vmem:[%s458] sm:%s451]
                  %461 = vst [vmem:[%s459] sm:%s451] %v460
                  %v462 = vld [vmem:[%s458 + $0x10] sm:%s451]
                  %463 = vst [vmem:[%s459 + $0xc] sm:%s451] %v462
                $region88: #{conv2d_same_padding.1} parent=68 // loop_footer
                  %s457 = sadd.s32 1, %s453
                $region89: #{conv2d_same_padding.1} parent=68 // loop_footer_branch
                  %452 = sbr.rel target = $region85
                $region90: #{conv2d_same_padding.1} parent=68 // loop_exit
                  _
              $region69: #{conv2d_same_padding.1} parent=35 // pred_fallthru
                _
            $region36: #{conv2d_same_padding.1} parent=31 // pred_fallthru
              _
            // Predicated region
            $region37: #{conv2d_same_padding.1} parent=31 // pred_check
              %p202 = pneg %p198
            $region38: #{conv2d_same_padding.1} parent=31 // pred_check_branch
              %204 = sbr.rel (%p202) target = $region40
            $region39: #{conv2d_same_padding.1} parent=31 // pred_region
              %s205 = sshll.u32 1, %s194
              %s206 = ssub.s32 %s205, 1
              loop: start=0, step=1, limit=1
              $region41: #{conv2d_same_padding.1} parent=39 // loop_pre_header
                _
              $region42: #{conv2d_same_padding.1} parent=39 // loop_header
                %s208 = sphi 0, %s212
                %p209 = scmp.ge.s32.totalorder %s208, 1
                %s213 = sphi %s193, %s193
                %s214 = sphi %s183, %s183
              $region43: #{conv2d_same_padding.1} parent=39 // loop_header_branch
                %211 = sbr.rel (%p209) target = $region47
              $region44: #{conv2d_same_padding.1} parent=39 // loop_body
                %v215 = vld [vmem:[%s213] sm:%s206]
                %216 = vst [vmem:[%s214] sm:%s206] %v215
                %v217 = vld [vmem:[%s213 + $0x10] sm:%s206]
                %218 = vst [vmem:[%s214 + $0xc] sm:%s206] %v217
              $region45: #{conv2d_same_padding.1} parent=39 // loop_footer
                %s212 = sadd.s32 1, %s208
              $region46: #{conv2d_same_padding.1} parent=39 // loop_footer_branch
                %207 = sbr.rel target = $region42
              $region47: #{conv2d_same_padding.1} parent=39 // loop_exit
                _
            $region40: #{conv2d_same_padding.1} parent=31 // pred_fallthru
              _
          $region32: #{conv2d_same_padding.1} parent=27 // pred_fallthru
            _
          %464 = vnop
        $region28: #{conv2d_same_padding.1} parent=23 // pred_fallthru
          _
        // Predicated region
        $region91: #{conv2d_same_padding.1} parent=23 // pred_check
          %p465 = pneg %p76
        $region92: #{conv2d_same_padding.1} parent=23 // pred_check_branch
          %467 = sbr.rel (%p465) target = $region94
        $region93: #{conv2d_same_padding.1} parent=23 // pred_region
          %s468 = sand.u32 %s66, 1
          %s469 = sand.u32 %s66, 1
          %s470 = smul.addr %s469, 8
          %s471 = scalar_lea.vmem [#allocation4], %s470
          %s472 = sadd.s32 %s18, 1
          %s473 = smul.u32 %s472, 3
          %s474 = smul.addr %s17, 8
          %s475 = sadd.s32 %s473, %s474
          %s476 = smul.addr %s475, 4
          %s477 = scalar_lea.vmem %s1, %s476
          // Predicated region
          $region95: #{conv2d_same_padding.1} parent=93 // pred_check
            _
          $region96: #{conv2d_same_padding.1} parent=93 // pred_check_branch
            %479 = sbr.rel (0) target = $region98
          $region97: #{conv2d_same_padding.1} parent=93 // pred_region
            // Predicated region
            $region99: #{conv2d_same_padding.1} parent=97 // pred_check
              _
            $region100: #{conv2d_same_padding.1} parent=97 // pred_check_branch
              %481 = sbr.rel target = $region102
            $region101: #{conv2d_same_padding.1} parent=97 // pred_region
              // Predicated region
              $region114: #{conv2d_same_padding.1} parent=101 // pred_check
                _
              $region115: #{conv2d_same_padding.1} parent=101 // pred_check_branch
                %499 = sbr.rel (0) target = $region117
              $region116: #{conv2d_same_padding.1} parent=101 // pred_region
                loop: start=0, step=1, limit=1
                $region118: #{conv2d_same_padding.1} parent=116 // loop_pre_header
                  _
                $region119: #{conv2d_same_padding.1} parent=116 // loop_header
                  %s501 = sphi 0, %s505
                  %p502 = scmp.ge.s32.totalorder %s501, 1
                  %s506 = sphi %s477, %s477
                  %s507 = sphi %s471, %s471
                $region120: #{conv2d_same_padding.1} parent=116 // loop_header_branch
                  %504 = sbr.rel (%p502) target = $region124
                $region121: #{conv2d_same_padding.1} parent=116 // loop_body
                  _
                $region122: #{conv2d_same_padding.1} parent=116 // loop_footer
                  %s505 = sadd.s32 1, %s501
                $region123: #{conv2d_same_padding.1} parent=116 // loop_footer_branch
                  %500 = sbr.rel target = $region119
                $region124: #{conv2d_same_padding.1} parent=116 // loop_exit
                  _
                %s509 = ssub.s32 16, 1
                loop: start=0, step=1, limit=1
                $region125: #{conv2d_same_padding.1} parent=116 // loop_pre_header
                  _
                $region126: #{conv2d_same_padding.1} parent=116 // loop_header
                  %s511 = sphi 0, %s515
                  %p512 = scmp.ge.s32.totalorder %s511, 1
                  %s516 = sphi %s477, %s477
                  %s517 = sphi %s471, %s471
                $region127: #{conv2d_same_padding.1} parent=116 // loop_header_branch
                  %514 = sbr.rel (%p512) target = $region131
                $region128: #{conv2d_same_padding.1} parent=116 // loop_body
                  %v518 = vld [vmem:[%s516] sm:%s509]
                  %519 = vst [vmem:[%s517] sm:%s509] %v518
                  %v520 = vld [vmem:[%s516 + $0x10] sm:%s509]
                  %521 = vst [vmem:[%s517 + $0x4] sm:%s509] %v520
                $region129: #{conv2d_same_padding.1} parent=116 // loop_footer
                  %s515 = sadd.s32 1, %s511
                $region130: #{conv2d_same_padding.1} parent=116 // loop_footer_branch
                  %510 = sbr.rel target = $region126
                $region131: #{conv2d_same_padding.1} parent=116 // loop_exit
                  _
              $region117: #{conv2d_same_padding.1} parent=101 // pred_fallthru
                _
            $region102: #{conv2d_same_padding.1} parent=97 // pred_fallthru
              _
            // Predicated region
            $region103: #{conv2d_same_padding.1} parent=97 // pred_check
              _
            $region104: #{conv2d_same_padding.1} parent=97 // pred_check_branch
              %483 = sbr.rel (0) target = $region106
            $region105: #{conv2d_same_padding.1} parent=97 // pred_region
              %s485 = ssub.s32 16, 1
              loop: start=0, step=1, limit=1
              $region107: #{conv2d_same_padding.1} parent=105 // loop_pre_header
                _
              $region108: #{conv2d_same_padding.1} parent=105 // loop_header
                %s487 = sphi 0, %s491
                %p488 = scmp.ge.s32.totalorder %s487, 1
                %s492 = sphi %s477, %s477
                %s493 = sphi %s471, %s471
              $region109: #{conv2d_same_padding.1} parent=105 // loop_header_branch
                %490 = sbr.rel (%p488) target = $region113
              $region110: #{conv2d_same_padding.1} parent=105 // loop_body
                %v494 = vld [vmem:[%s492] sm:%s485]
                %495 = vst [vmem:[%s493] sm:%s485] %v494
                %v496 = vld [vmem:[%s492 + $0x10] sm:%s485]
                %497 = vst [vmem:[%s493 + $0x4] sm:%s485] %v496
              $region111: #{conv2d_same_padding.1} parent=105 // loop_footer
                %s491 = sadd.s32 1, %s487
              $region112: #{conv2d_same_padding.1} parent=105 // loop_footer_branch
                %486 = sbr.rel target = $region108
              $region113: #{conv2d_same_padding.1} parent=105 // loop_exit
                _
            $region106: #{conv2d_same_padding.1} parent=97 // pred_fallthru
              _
          $region98: #{conv2d_same_padding.1} parent=93 // pred_fallthru
            _
          %522 = vnop
        $region94: #{conv2d_same_padding.1} parent=23 // pred_fallthru
          _
      $region24: #{conv2d_same_padding.1} parent=5 // pred_fallthru
        _
      %p523 = scmp.le.s32.totalorder 1, %s10
      %p524 = scmp.lt.s32.totalorder %s10, 3
      %p525 = pnand %p523, %p524
      %p526 = pneg %p525
      // Predicated region
      $region132: #{conv2d_same_padding.1} parent=5 // pred_check
        _
      $region133: #{conv2d_same_padding.1} parent=5 // pred_check_branch
        %528 = sbr.rel (%p525) target = $region135
      $region134: #{conv2d_same_padding.1} parent=5 // pred_region
        %s529 = ssub.s32 %s10, 1
        %s530 = sand.u32 %s37, 1
        %s531 = sand.u32 %s37, 1
        %s532 = smul.addr %s531, 24
        %s533 = scalar_lea.vmem [#allocation3], %s532
        // Predicated region
        $region136: #{conv2d_same_padding.1} parent=134 // pred_check
          %p534 = pneg %p50
        $region137: #{conv2d_same_padding.1} parent=134 // pred_check_branch
          %536 = sbr.rel (%p534) target = $region139
        $region138: #{conv2d_same_padding.1} parent=134 // pred_region
          _
        $region139: #{conv2d_same_padding.1} parent=134 // pred_fallthru
          _
        %s537 = sand.u32 %s69, 1
        %s538 = sand.u32 %s69, 1
        %s539 = smul.addr %s538, 8
        %s540 = scalar_lea.vmem [#allocation4], %s539
        // Predicated region
        $region140: #{conv2d_same_padding.1} parent=134 // pred_check
          %p541 = pneg %p82
        $region141: #{conv2d_same_padding.1} parent=134 // pred_check_branch
          %543 = sbr.rel (%p541) target = $region143
        $region142: #{conv2d_same_padding.1} parent=134 // pred_region
          _
        $region143: #{conv2d_same_padding.1} parent=134 // pred_fallthru
          _
        %s544 = sand.u32 %s37, 1
        %s545 = sand.u32 %s37, 1
        %s546 = smul.addr %s545, 24
        %s547 = scalar_lea.vmem [#allocation3], %s546
        %p548 = pneg %p50
        %p549 = pneg %p47
        %s550 = sand.u32 %s69, 1
        %s551 = sand.u32 %s69, 1
        %s552 = smul.addr %s551, 8
        %s553 = scalar_lea.vmem [#allocation4], %s552
        %p554 = pneg %p82
        %p555 = pneg %p79
        %p556 = pneg %p103
        %p557 = pneg %p100
        %p558 = pneg %p124
        %p559 = pneg %p121
        %p560 = pneg %p152
        %p561 = pneg %p149
        %s562 = smul.u32 3, %s20
        %p563 = scmp.lt.s32.totalorder %s19, 1
        %s564 = scalar_select %p563, %s19, 1
        %p565 = scmp.lt.s32.totalorder %s562, 2
        %s566 = scalar_select %p565, %s562, 2
        %s567 = smul.addr %s564, 3
        %s568 = sadd.s32 %s566, %s567
        %s569 = smul.addr %s568, 8
        %s570 = scalar_lea.vmem %s4, %s569
        %s571 = smul.u32 3, %s20
        %s572 = ssub.s32 4, %s571
        %p573 = scmp.lt.s32.totalorder %s572, 3
        %s574 = scalar_select %p573, %s572, 3
        %s575 = smul.u32 8, %s574
        %s576 = sadd.s32 %s20, 1
        %s577 = smul.u32 %s576, 3
        %s578 = smul.u32 3, %s20
        %p579 = scmp.lt.s32.totalorder %s19, 1
        %s580 = scalar_select %p579, %s19, 1
        %p581 = scmp.lt.s32.totalorder %s578, 2
        %s582 = scalar_select %p581, %s578, 2
        %s583 = smul.addr %s580, 3
        %s584 = sadd.s32 %s582, %s583
        %s585 = smul.addr %s584, 8
        %s586 = scalar_lea.vmem %s4, %s585
        %s587 = smul.u32 3, %s20
        %v589 = vld [vmem:[%s533] sm:$0xff]
        %v590 = vld [vmem:[%s533 + $0x8] sm:$0xf]
        %v591 = vld [vmem:[%s533 + $0xc] sm:$0xff]
        %v592 = vld [vmem:[%s533 + $0x14] sm:$0xf]
        %593 = vst [vmem:[#allocation2] sm:$0xff] %v589
        %594 = vst [vmem:[#allocation2 + $0x8] sm:$0xf] %v590
        %595 = vst [vmem:[#allocation2 + $0xc] sm:$0xff] %v591
        %596 = vst [vmem:[#allocation2 + $0x14] sm:$0xf] %v592
        %v597 = vld [vmem:[%s533] sm:$0xff]
        %v598 = vld [vmem:[%s533 + $0x8] sm:$0xf]
        %v599 = vld [vmem:[%s533 + $0xc] sm:$0xff]
        %v600 = vld [vmem:[%s533 + $0x14] sm:$0xf]
        %605 = vrot.lane.b32.xlu0 %v597, 127
        %v606 = vpop.permute.xlu0 %605
        %607 = vrot.lane.b32.xlu0 %v598, 127
        %v608 = vpop.permute.xlu0 %607
        %609 = vrot.lane.b32.xlu0 %v599, 127
        %v610 = vpop.permute.xlu0 %609
        %611 = vrot.lane.b32.xlu0 %v600, 127
        %v612 = vpop.permute.xlu0 %611
        %v613 = vrot.slane %v606, 4
        %v614 = vrot.slane %v608, 4
        %v615 = vrot.slane %v610, 4
        %v616 = vrot.slane %v612, 4
        %vm617 = vcmask 1043456
        %v618 = vsel %vm617, %v613, %v614
        %vm619 = vcmask 1039360
        %v620 = vsel %vm619, %v606, %v618
        %v621 = vsel %vm617, %v615, %v616
        %v622 = vsel %vm619, %v610, %v621
        %627 = vst [vmem:[#allocation2 + $0x18] sm:$0xff] %v620
        %vm628 = vcmask 1035264
        %629 = vst.msk [vmem:[#allocation2 + $0x20] sm:$0xf] %vm628, %v608
        %630 = vst [vmem:[#allocation2 + $0x24] sm:$0xff] %v622
        %631 = vst.msk [vmem:[#allocation2 + $0x2c] sm:$0xf] %vm628, %v612
        %v632 = vld [vmem:[%s540] sm:$0xf]
        %v633 = vld [vmem:[%s540 + $0x4] sm:$0xf]
        %636 = vrot.lane.b32.xlu0 %v632, 127
        %v637 = vpop.permute.xlu0 %636
        %638 = vrot.lane.b32.xlu0 %v633, 127
        %v639 = vpop.permute.xlu0 %638
        %vm642 = vcmask 1044472
        %643 = vst.msk [vmem:[#allocation2 + $0x20] sm:$0xf] %vm642, %v637
        %644 = vst.msk [vmem:[#allocation2 + $0x2c] sm:$0xf] %vm642, %v639
        %v645 = vld [vmem:[%s533] sm:$0xff]
        %v646 = vld [vmem:[%s533 + $0x8] sm:$0xf]
        %v647 = vld [vmem:[%s533 + $0xc] sm:$0xff]
        %v648 = vld [vmem:[%s533 + $0x14] sm:$0xf]
        %653 = vrot.lane.b32.xlu0 %v645, 126
        %v654 = vpop.permute.xlu0 %653
        %655 = vrot.lane.b32.xlu0 %v646, 126
        %v656 = vpop.permute.xlu0 %655
        %657 = vrot.lane.b32.xlu0 %v647, 126
        %v658 = vpop.permute.xlu0 %657
        %659 = vrot.lane.b32.xlu0 %v648, 126
        %v660 = vpop.permute.xlu0 %659
        %v661 = vrot.slane %v654, 4
        %v662 = vrot.slane %v656, 4
        %v663 = vrot.slane %v658, 4
        %v664 = vrot.slane %v660, 4
        %v665 = vsel %vm617, %v661, %v662
        %vm666 = vcmask 1031168
        %v667 = vsel %vm666, %v654, %v665
        %v668 = vsel %vm617, %v663, %v664
        %v669 = vsel %vm666, %v658, %v668
        %674 = vst [vmem:[#allocation2 + $0x30] sm:$0xff] %v667
        %vm675 = vcmask 1027072
        %676 = vst.msk [vmem:[#allocation2 + $0x38] sm:$0xf] %vm675, %v656
        %677 = vst [vmem:[#allocation2 + $0x3c] sm:$0xff] %v669
        %678 = vst.msk [vmem:[#allocation2 + $0x44] sm:$0xf] %vm675, %v660
        %v679 = vld [vmem:[%s540] sm:$0xf]
        %v680 = vld [vmem:[%s540 + $0x4] sm:$0xf]
        %683 = vrot.lane.b32.xlu0 %v679, 126
        %v684 = vpop.permute.xlu0 %683
        %685 = vrot.lane.b32.xlu0 %v680, 126
        %v686 = vpop.permute.xlu0 %685
        %vm689 = vcmask 1044464
        %690 = vst.msk [vmem:[#allocation2 + $0x38] sm:$0xf] %vm689, %v684
        %691 = vst.msk [vmem:[#allocation2 + $0x44] sm:$0xf] %vm689, %v686
        %v692 = vld [vmem:[%s533] sm:$0xff]
        %v693 = vld [vmem:[%s533 + $0x8] sm:$0xf]
        %v694 = vld [vmem:[%s533 + $0xc] sm:$0xff]
        %v695 = vld [vmem:[%s533 + $0x14] sm:$0xf]
        %700 = vrot.lane.b32.xlu0 %v692, 110
        %v701 = vpop.permute.xlu0 %700
        %702 = vrot.lane.b32.xlu0 %v693, 110
        %v703 = vpop.permute.xlu0 %702
        %704 = vrot.lane.b32.xlu0 %v694, 110
        %v705 = vpop.permute.xlu0 %704
        %706 = vrot.lane.b32.xlu0 %v695, 110
        %v707 = vpop.permute.xlu0 %706
        %v708 = vrot.slane %v701, 4
        %v709 = vrot.slane %v703, 4
        %v710 = vrot.slane %v705, 4
        %v711 = vrot.slane %v707, 4
        %v712 = vsel %vm617, %v708, %v709
        %vm713 = vcmask 900096
        %v714 = vsel %vm713, %v701, %v712
        %v715 = vsel %vm617, %v710, %v711
        %v716 = vsel %vm713, %v705, %v715
        %721 = vst [vmem:[#allocation2 + $0x48] sm:$0xff] %v714
        %vm722 = vcmask 896000
        %723 = vst.msk [vmem:[#allocation2 + $0x50] sm:$0xf] %vm722, %v703
        %724 = vst [vmem:[#allocation2 + $0x54] sm:$0xff] %v716
        %725 = vst.msk [vmem:[#allocation2 + $0x5c] sm:$0xf] %vm722, %v707
        %v726 = vld [vmem:[%s540] sm:$0xf]
        %v727 = vld [vmem:[%s540 + $0x4] sm:$0xf]
        %730 = vrot.lane.b32.xlu0 %v726, 110
        %v731 = vpop.permute.xlu0 %730
        %732 = vrot.lane.b32.xlu0 %v727, 110
        %v733 = vpop.permute.xlu0 %732
        %vm736 = vcmask 1044336
        %737 = vst.msk [vmem:[#allocation2 + $0x50] sm:$0xf] %vm736, %v731
        %738 = vst.msk [vmem:[#allocation2 + $0x5c] sm:$0xf] %vm736, %v733
        %v739 = vld [vmem:[%s533] sm:$0xff]
        %v740 = vld [vmem:[%s533 + $0x8] sm:$0xf]
        %v741 = vld [vmem:[%s533 + $0xc] sm:$0xff]
        %v742 = vld [vmem:[%s533 + $0x14] sm:$0xf]
        %747 = vrot.lane.b32.xlu0 %v739, 109
        %v748 = vpop.permute.xlu0 %747
        %749 = vrot.lane.b32.xlu0 %v740, 109
        %v750 = vpop.permute.xlu0 %749
        %751 = vrot.lane.b32.xlu0 %v741, 109
        %v752 = vpop.permute.xlu0 %751
        %753 = vrot.lane.b32.xlu0 %v742, 109
        %v754 = vpop.permute.xlu0 %753
        %v755 = vrot.slane %v748, 4
        %v756 = vrot.slane %v750, 4
        %v757 = vrot.slane %v752, 4
        %v758 = vrot.slane %v754, 4
        %v759 = vsel %vm617, %v755, %v756
        %vm760 = vcmask 891904
        %v761 = vsel %vm760, %v748, %v759
        %v762 = vsel %vm617, %v757, %v758
        %v763 = vsel %vm760, %v752, %v762
        %768 = vst [vmem:[#allocation2 + $0x60] sm:$0xff] %v761
        %vm769 = vcmask 887808
        %770 = vst.msk [vmem:[#allocation2 + $0x68] sm:$0xf] %vm769, %v750
        %771 = vst [vmem:[#allocation2 + $0x6c] sm:$0xff] %v763
        %772 = vst.msk [vmem:[#allocation2 + $0x74] sm:$0xf] %vm769, %v754
        %v773 = vld [vmem:[%s540] sm:$0xf]
        %v774 = vld [vmem:[%s540 + $0x4] sm:$0xf]
        %777 = vrot.lane.b32.xlu0 %v773, 109
        %v778 = vpop.permute.xlu0 %777
        %779 = vrot.lane.b32.xlu0 %v774, 109
        %v780 = vpop.permute.xlu0 %779
        %vm783 = vcmask 1044328
        %784 = vst.msk [vmem:[#allocation2 + $0x68] sm:$0xf] %vm783, %v778
        %785 = vst.msk [vmem:[#allocation2 + $0x74] sm:$0xf] %vm783, %v780
        %v786 = vld [vmem:[%s533] sm:$0xff]
        %v787 = vld [vmem:[%s533 + $0x8] sm:$0xf]
        %v788 = vld [vmem:[%s533 + $0xc] sm:$0xff]
        %v789 = vld [vmem:[%s533 + $0x14] sm:$0xf]
        %794 = vrot.lane.b32.xlu0 %v786, 108
        %v795 = vpop.permute.xlu0 %794
        %796 = vrot.lane.b32.xlu0 %v787, 108
        %v797 = vpop.permute.xlu0 %796
        %798 = vrot.lane.b32.xlu0 %v788, 108
        %v799 = vpop.permute.xlu0 %798
        %800 = vrot.lane.b32.xlu0 %v789, 108
        %v801 = vpop.permute.xlu0 %800
        %v802 = vrot.slane %v795, 4
        %v803 = vrot.slane %v797, 4
        %v804 = vrot.slane %v799, 4
        %v805 = vrot.slane %v801, 4
        %v806 = vsel %vm617, %v802, %v803
        %vm807 = vcmask 883712
        %v808 = vsel %vm807, %v795, %v806
        %v809 = vsel %vm617, %v804, %v805
        %v810 = vsel %vm807, %v799, %v809
        %815 = vst [vmem:[#allocation2 + $0x78] sm:$0xff] %v808
        %vm816 = vcmask 879616
        %817 = vst.msk [vmem:[#allocation2 + $0x80] sm:$0xf] %vm816, %v797
        %818 = vst [vmem:[#allocation2 + $0x84] sm:$0xff] %v810
        %819 = vst.msk [vmem:[#allocation2 + $0x8c] sm:$0xf] %vm816, %v801
        %v820 = vld [vmem:[%s540] sm:$0xf]
        %v821 = vld [vmem:[%s540 + $0x4] sm:$0xf]
        %824 = vrot.lane.b32.xlu0 %v820, 108
        %v825 = vpop.permute.xlu0 %824
        %826 = vrot.lane.b32.xlu0 %v821, 108
        %v827 = vpop.permute.xlu0 %826
        %vm830 = vcmask 1044320
        %831 = vst.msk [vmem:[#allocation2 + $0x80] sm:$0xf] %vm830, %v825
        %832 = vst.msk [vmem:[#allocation2 + $0x8c] sm:$0xf] %vm830, %v827
        %v833 = vld [vmem:[%s533] sm:$0xff]
        %v834 = vld [vmem:[%s533 + $0x8] sm:$0xf]
        %v835 = vld [vmem:[%s533 + $0xc] sm:$0xff]
        %v836 = vld [vmem:[%s533 + $0x14] sm:$0xf]
        %841 = vrot.lane.b32.xlu0 %v833, 92
        %v842 = vpop.permute.xlu0 %841
        %843 = vrot.lane.b32.xlu0 %v834, 92
        %v844 = vpop.permute.xlu0 %843
        %845 = vrot.lane.b32.xlu0 %v835, 92
        %v846 = vpop.permute.xlu0 %845
        %847 = vrot.lane.b32.xlu0 %v836, 92
        %v848 = vpop.permute.xlu0 %847
        %v849 = vrot.slane %v842, 4
        %v850 = vrot.slane %v844, 4
        %v851 = vrot.slane %v846, 4
        %v852 = vrot.slane %v848, 4
        %v853 = vsel %vm617, %v849, %v850
        %vm854 = vcmask 752640
        %v855 = vsel %vm854, %v842, %v853
        %v856 = vsel %vm617, %v851, %v852
        %v857 = vsel %vm854, %v846, %v856
        %862 = vst [vmem:[#allocation2 + $0x90] sm:$0xff] %v855
        %vm863 = vcmask 748544
        %864 = vst.msk [vmem:[#allocation2 + $0x98] sm:$0xf] %vm863, %v844
        %865 = vst [vmem:[#allocation2 + $0x9c] sm:$0xff] %v857
        %866 = vst.msk [vmem:[#allocation2 + $0xa4] sm:$0xf] %vm863, %v848
        %v867 = vld [vmem:[%s540] sm:$0xf]
        %v868 = vld [vmem:[%s540 + $0x4] sm:$0xf]
        %871 = vrot.lane.b32.xlu0 %v867, 92
        %v872 = vpop.permute.xlu0 %871
        %873 = vrot.lane.b32.xlu0 %v868, 92
        %v874 = vpop.permute.xlu0 %873
        %vm877 = vcmask 1044192
        %878 = vst.msk [vmem:[#allocation2 + $0x98] sm:$0xf] %vm877, %v872
        %879 = vst.msk [vmem:[#allocation2 + $0xa4] sm:$0xf] %vm877, %v874
        %v880 = vld [vmem:[%s533] sm:$0xff]
        %v881 = vld [vmem:[%s533 + $0x8] sm:$0xf]
        %v882 = vld [vmem:[%s533 + $0xc] sm:$0xff]
        %v883 = vld [vmem:[%s533 + $0x14] sm:$0xf]
        %888 = vrot.lane.b32.xlu0 %v880, 91
        %v889 = vpop.permute.xlu0 %888
        %890 = vrot.lane.b32.xlu0 %v881, 91
        %v891 = vpop.permute.xlu0 %890
        %892 = vrot.lane.b32.xlu0 %v882, 91
        %v893 = vpop.permute.xlu0 %892
        %894 = vrot.lane.b32.xlu0 %v883, 91
        %v895 = vpop.permute.xlu0 %894
        %v896 = vrot.slane %v889, 4
        %v897 = vrot.slane %v891, 4
        %v898 = vrot.slane %v893, 4
        %v899 = vrot.slane %v895, 4
        %v900 = vsel %vm617, %v896, %v897
        %vm901 = vcmask 744448
        %v902 = vsel %vm901, %v889, %v900
        %v903 = vsel %vm617, %v898, %v899
        %v904 = vsel %vm901, %v893, %v903
        %909 = vst [vmem:[#allocation2 + $0xa8] sm:$0xff] %v902
        %vm910 = vcmask 740352
        %911 = vst.msk [vmem:[#allocation2 + $0xb0] sm:$0xf] %vm910, %v891
        %912 = vst [vmem:[#allocation2 + $0xb4] sm:$0xff] %v904
        %913 = vst.msk [vmem:[#allocation2 + $0xbc] sm:$0xf] %vm910, %v895
        %v914 = vld [vmem:[%s540] sm:$0xf]
        %v915 = vld [vmem:[%s540 + $0x4] sm:$0xf]
        %918 = vrot.lane.b32.xlu0 %v914, 91
        %v919 = vpop.permute.xlu0 %918
        %920 = vrot.lane.b32.xlu0 %v915, 91
        %v921 = vpop.permute.xlu0 %920
        %vm924 = vcmask 1044184
        %925 = vst.msk [vmem:[#allocation2 + $0xb0] sm:$0xf] %vm924, %v919
        %926 = vst.msk [vmem:[#allocation2 + $0xbc] sm:$0xf] %vm924, %v921
        %v927 = vld [vmem:[%s533] sm:$0xff]
        %v928 = vld [vmem:[%s533 + $0x8] sm:$0xf]
        %v929 = vld [vmem:[%s533 + $0xc] sm:$0xff]
        %v930 = vld [vmem:[%s533 + $0x14] sm:$0xf]
        %935 = vrot.lane.b32.xlu0 %v927, 90
        %v936 = vpop.permute.xlu0 %935
        %937 = vrot.lane.b32.xlu0 %v928, 90
        %v938 = vpop.permute.xlu0 %937
        %939 = vrot.lane.b32.xlu0 %v929, 90
        %v940 = vpop.permute.xlu0 %939
        %941 = vrot.lane.b32.xlu0 %v930, 90
        %v942 = vpop.permute.xlu0 %941
        %v943 = vrot.slane %v936, 4
        %v944 = vrot.slane %v938, 4
        %v945 = vrot.slane %v940, 4
        %v946 = vrot.slane %v942, 4
        %v947 = vsel %vm617, %v943, %v944
        %vm948 = vcmask 736256
        %v949 = vsel %vm948, %v936, %v947
        %v950 = vsel %vm617, %v945, %v946
        %v951 = vsel %vm948, %v940, %v950
        %956 = vst [vmem:[#allocation2 + $0xc0] sm:$0xff] %v949
        %vm957 = vcmask 732160
        %958 = vst.msk [vmem:[#allocation2 + $0xc8] sm:$0xf] %vm957, %v938
        %959 = vst [vmem:[#allocation2 + $0xcc] sm:$0xff] %v951
        %960 = vst.msk [vmem:[#allocation2 + $0xd4] sm:$0xf] %vm957, %v942
        %v961 = vld [vmem:[%s540] sm:$0xf]
        %v962 = vld [vmem:[%s540 + $0x4] sm:$0xf]
        %965 = vrot.lane.b32.xlu0 %v961, 90
        %v966 = vpop.permute.xlu0 %965
        %967 = vrot.lane.b32.xlu0 %v962, 90
        %v968 = vpop.permute.xlu0 %967
        %vm971 = vcmask 1044176
        %972 = vst.msk [vmem:[#allocation2 + $0xc8] sm:$0xf] %vm971, %v966
        %973 = vst.msk [vmem:[#allocation2 + $0xd4] sm:$0xf] %vm971, %v968
        %v974 = vld [vmem:[%s2] sm:$0xff]
        %v975 = vld [vmem:[#allocation2] sm:$0xff]
        %v976 = vld [vmem:[#allocation2 + $0x8] sm:$0xf]
        %v977 = vld [vmem:[#allocation2 + $0xc] sm:$0xff]
        %v978 = vld [vmem:[#allocation2 + $0x14] sm:$0xf]
        %v979 = vld [vmem:[#allocation2 + $0x18] sm:$0xff]
        %v980 = vld [vmem:[#allocation2 + $0x20] sm:$0xf]
        %v981 = vld [vmem:[#allocation2 + $0x24] sm:$0xff]
        %v982 = vld [vmem:[#allocation2 + $0x2c] sm:$0xf]
        %v983 = vld [vmem:[#allocation2 + $0x30] sm:$0xff]
        %v984 = vld [vmem:[#allocation2 + $0x38] sm:$0xf]
        %v985 = vld [vmem:[#allocation2 + $0x3c] sm:$0xff]
        %v986 = vld [vmem:[#allocation2 + $0x44] sm:$0xf]
        %v987 = vld [vmem:[#allocation2 + $0x48] sm:$0xff]
        %v988 = vld [vmem:[#allocation2 + $0x50] sm:$0xf]
        %v989 = vld [vmem:[#allocation2 + $0x54] sm:$0xff]
        %v990 = vld [vmem:[#allocation2 + $0x5c] sm:$0xf]
        %v991 = vld [vmem:[#allocation2 + $0x60] sm:$0xff]
        %v992 = vld [vmem:[#allocation2 + $0x68] sm:$0xf]
        %v993 = vld [vmem:[#allocation2 + $0x6c] sm:$0xff]
        %v994 = vld [vmem:[#allocation2 + $0x74] sm:$0xf]
        %v995 = vld [vmem:[#allocation2 + $0x78] sm:$0xff]
        %v996 = vld [vmem:[#allocation2 + $0x80] sm:$0xf]
        %v997 = vld [vmem:[#allocation2 + $0x84] sm:$0xff]
        %v998 = vld [vmem:[#allocation2 + $0x8c] sm:$0xf]
        %v999 = vld [vmem:[#allocation2 + $0x90] sm:$0xff]
        %v1000 = vld [vmem:[#allocation2 + $0x98] sm:$0xf]
        %v1001 = vld [vmem:[#allocation2 + $0x9c] sm:$0xff]
        %v1002 = vld [vmem:[#allocation2 + $0xa4] sm:$0xf]
        %v1003 = vld [vmem:[#allocation2 + $0xa8] sm:$0xff]
        %v1004 = vld [vmem:[#allocation2 + $0xb0] sm:$0xf]
        %v1005 = vld [vmem:[#allocation2 + $0xb4] sm:$0xff]
        %v1006 = vld [vmem:[#allocation2 + $0xbc] sm:$0xf]
        %v1007 = vld [vmem:[#allocation2 + $0xc0] sm:$0xff]
        %v1008 = vld [vmem:[#allocation2 + $0xc8] sm:$0xf]
        %v1009 = vld [vmem:[#allocation2 + $0xcc] sm:$0xff]
        %v1010 = vld [vmem:[#allocation2 + $0xd4] sm:$0xf]
        %v1011 = vld [vmem:[%s3] sm:$0xff]
        %1013 = vset.pattern.permute.xlu0 0
        %1014 = vperm.xlu0 %1013, %v1011
        %v1015 = vpop.permute.xlu0 %1014
        %v1018 = vunpack.c.l.b16 %v974
        %v1019 = vunpack.c.h.b16 %v974
        %v1020 = vpack.c.b16 %v1018, %v1018
        %v1021 = vpack.c.b16 %v1019, %v1019
        %v1059 = vunpack.c.l.b16 %v975
        %v1060 = vunpack.c.h.b16 %v975
        %v1061 = vunpack.c.l.b16 %v976
        %v1062 = vunpack.c.l.b16 %v977
        %v1063 = vunpack.c.h.b16 %v977
        %v1064 = vunpack.c.l.b16 %v978
        %v1065 = vunpack.c.l.b16 %v979
        %v1066 = vunpack.c.h.b16 %v979
        %v1067 = vunpack.c.l.b16 %v980
        %v1068 = vunpack.c.l.b16 %v981
        %v1069 = vunpack.c.h.b16 %v981
        %v1070 = vunpack.c.l.b16 %v982
        %v1071 = vunpack.c.l.b16 %v983
        %v1072 = vunpack.c.h.b16 %v983
        %v1073 = vunpack.c.l.b16 %v984
        %v1074 = vunpack.c.l.b16 %v985
        %v1075 = vunpack.c.h.b16 %v985
        %v1076 = vunpack.c.l.b16 %v986
        %v1077 = vunpack.c.l.b16 %v987
        %v1078 = vunpack.c.h.b16 %v987
        %v1079 = vunpack.c.l.b16 %v988
        %v1080 = vunpack.c.l.b16 %v989
        %v1081 = vunpack.c.h.b16 %v989
        %v1082 = vunpack.c.l.b16 %v990
        %v1083 = vunpack.c.l.b16 %v991
        %v1084 = vunpack.c.h.b16 %v991
        %v1085 = vunpack.c.l.b16 %v992
        %v1086 = vunpack.c.l.b16 %v993
        %v1087 = vunpack.c.h.b16 %v993
        %v1088 = vunpack.c.l.b16 %v994
        %v1089 = vunpack.c.l.b16 %v995
        %v1090 = vunpack.c.h.b16 %v995
        %v1091 = vunpack.c.l.b16 %v996
        %v1092 = vunpack.c.l.b16 %v997
        %v1093 = vunpack.c.h.b16 %v997
        %v1094 = vunpack.c.l.b16 %v998
        %v1095 = vunpack.c.l.b16 %v999
        %v1096 = vunpack.c.h.b16 %v999
        %v1097 = vunpack.c.l.b16 %v1000
        %v1098 = vunpack.c.l.b16 %v1001
        %v1099 = vunpack.c.h.b16 %v1001
        %v1100 = vunpack.c.l.b16 %v1002
        %v1101 = vunpack.c.l.b16 %v1003
        %v1102 = vunpack.c.h.b16 %v1003
        %v1103 = vunpack.c.l.b16 %v1004
        %v1104 = vunpack.c.l.b16 %v1005
        %v1105 = vunpack.c.h.b16 %v1005
        %v1106 = vunpack.c.l.b16 %v1006
        %v1107 = vunpack.c.l.b16 %v1007
        %v1108 = vunpack.c.h.b16 %v1007
        %v1109 = vunpack.c.l.b16 %v1008
        %v1110 = vunpack.c.l.b16 %v1009
        %v1111 = vunpack.c.h.b16 %v1009
        %v1112 = vunpack.c.l.b16 %v1010
        %v1113 = vpack.c.b16 %v1062, %v1059
        %v1114 = vpack.c.b16 %v1063, %v1060
        %v1115 = vpack.c.b16 %v1064, %v1061
        %v1116 = vpack.c.b16 %v1068, %v1065
        %v1117 = vpack.c.b16 %v1069, %v1066
        %v1118 = vpack.c.b16 %v1070, %v1067
        %v1119 = vpack.c.b16 %v1074, %v1071
        %v1120 = vpack.c.b16 %v1075, %v1072
        %v1121 = vpack.c.b16 %v1076, %v1073
        %v1122 = vpack.c.b16 %v1080, %v1077
        %v1123 = vpack.c.b16 %v1081, %v1078
        %v1124 = vpack.c.b16 %v1082, %v1079
        %v1125 = vpack.c.b16 %v1086, %v1083
        %v1126 = vpack.c.b16 %v1087, %v1084
        %v1127 = vpack.c.b16 %v1088, %v1085
        %v1128 = vpack.c.b16 %v1092, %v1089
        %v1129 = vpack.c.b16 %v1093, %v1090
        %v1130 = vpack.c.b16 %v1094, %v1091
        %v1131 = vpack.c.b16 %v1098, %v1095
        %v1132 = vpack.c.b16 %v1099, %v1096
        %v1133 = vpack.c.b16 %v1100, %v1097
        %v1134 = vpack.c.b16 %v1104, %v1101
        %v1135 = vpack.c.b16 %v1105, %v1102
        %v1136 = vpack.c.b16 %v1106, %v1103
        %v1137 = vpack.c.b16 %v1110, %v1107
        %v1138 = vpack.c.b16 %v1111, %v1108
        %v1139 = vpack.c.b16 %v1112, %v1109
        %vm1167 = vcmask 130048
        %v1169 = vsel %vm1167, %v1021, 0
        %1171 = vmatpush.bf16.msra.mxu0 %v1134
        %1172 = vmatpush.bf16.msra.mxu0 %v1131
        %1173 = vmatpush.bf16.msra.mxu0 %v1128
        %1174 = vmatpush.bf16.msra.mxu0 %v1125
        %1175 = vmatpush.bf16.msra.mxu0 %v1122
        %1176 = vmatpush.bf16.msra.mxu0 %v1119
        %1177 = vmatpush.bf16.msra.mxu0 %v1116
        %1178 = vmatpush.bf16.msra.mxu0 %v1113
        %1179 = vmatmul.bf16.gmra.mxu0 %v1020
        %v1180 = vpop.f32.mrf.mxu0
        %v1181 = vadd.f32 %v1015, %v1180
        %v1182 = vpop.f32.mrf.mxu0
        %1183 = vdwg.mxu0
        %1184 = vmatpush.bf16.msra.mxu0 0
        %1185 = vmatpush.bf16.msra.mxu0 0
        %1186 = vmatpush.bf16.msra.mxu0 0
        %1187 = vmatpush.bf16.msra.mxu0 0
        %1188 = vmatpush.bf16.msra.mxu0 0
        %1189 = vmatpush.bf16.msra.mxu0 0
        %1190 = vmatpush.bf16.msra.mxu0 0
        %1191 = vmatpush.bf16.msra.mxu0 %v1137
        %1192 = vmatmul.bf16.gmra.mxu0 %v1169
        %v1193 = vpop.f32.mrf.mxu0
        %v1194 = vadd.f32 %v1181, %v1193
        %v1195 = vpop.f32.mrf.mxu0
        %1196 = vdwg.mxu0
        %1197 = vmatpush.bf16.msra.mxu0 %v1135
        %1198 = vmatpush.bf16.msra.mxu0 %v1132
        %1199 = vmatpush.bf16.msra.mxu0 %v1129
        %1200 = vmatpush.bf16.msra.mxu0 %v1126
        %1201 = vmatpush.bf16.msra.mxu0 %v1123
        %1202 = vmatpush.bf16.msra.mxu0 %v1120
        %1203 = vmatpush.bf16.msra.mxu0 %v1117
        %1204 = vmatpush.bf16.msra.mxu0 %v1114
        %1205 = vmatmul.bf16.gmra.mxu0 %v1020
        %v1206 = vpop.f32.mrf.mxu0
        %v1207 = vadd.f32 %v1015, %v1206
        %v1208 = vpop.f32.mrf.mxu0
        %1209 = vdwg.mxu0
        %1210 = vmatpush.bf16.msra.mxu0 0
        %1211 = vmatpush.bf16.msra.mxu0 0
        %1212 = vmatpush.bf16.msra.mxu0 0
        %1213 = vmatpush.bf16.msra.mxu0 0
        %1214 = vmatpush.bf16.msra.mxu0 0
        %1215 = vmatpush.bf16.msra.mxu0 0
        %1216 = vmatpush.bf16.msra.mxu0 0
        %1217 = vmatpush.bf16.msra.mxu0 %v1138
        %1218 = vmatmul.bf16.gmra.mxu0 %v1169
        %v1219 = vpop.f32.mrf.mxu0
        %v1220 = vadd.f32 %v1207, %v1219
        %v1221 = vpop.f32.mrf.mxu0
        %1222 = vdwg.mxu0
        %1223 = vmatpush.bf16.msra.mxu0 %v1136
        %1224 = vmatpush.bf16.msra.mxu0 %v1133
        %1225 = vmatpush.bf16.msra.mxu0 %v1130
        %1226 = vmatpush.bf16.msra.mxu0 %v1127
        %1227 = vmatpush.bf16.msra.mxu0 %v1124
        %1228 = vmatpush.bf16.msra.mxu0 %v1121
        %1229 = vmatpush.bf16.msra.mxu0 %v1118
        %1230 = vmatpush.bf16.msra.mxu0 %v1115
        %1231 = vmatmul.bf16.gmra.mxu0 %v1020
        %v1232 = vpop.f32.mrf.mxu0
        %v1233 = vadd.f32 %v1015, %v1232
        %v1234 = vpop.f32.mrf.mxu0
        %1235 = vdwg.mxu0
        %1236 = vmatpush.bf16.msra.mxu0 0
        %1237 = vmatpush.bf16.msra.mxu0 0
        %1238 = vmatpush.bf16.msra.mxu0 0
        %1239 = vmatpush.bf16.msra.mxu0 0
        %1240 = vmatpush.bf16.msra.mxu0 0
        %1241 = vmatpush.bf16.msra.mxu0 0
        %1242 = vmatpush.bf16.msra.mxu0 0
        %1243 = vmatpush.bf16.msra.mxu0 %v1139
        %1244 = vmatmul.bf16.gmra.mxu0 %v1169
        %v1245 = vpop.f32.mrf.mxu0
        %v1246 = vadd.f32 %v1233, %v1245
        %v1247 = vpop.f32.mrf.mxu0
        %1248 = vdwg.mxu0
        %1249 = vst [vmem:[%s586] sm:$0xff] %v1194
        %1250 = vst [vmem:[%s586 + $0x8] sm:$0xff] %v1220
        %1251 = vst [vmem:[%s586 + $0x10] sm:$0xff] %v1246
        %s1252 = smul.u32 3, %s20
        %p1253 = scmp.lt.s32.totalorder %s19, 1
        %s1254 = scalar_select %p1253, %s19, 1
        %p1255 = scmp.lt.s32.totalorder %s1252, 2
        %s1256 = scalar_select %p1255, %s1252, 2
        %s1257 = smul.addr %s1254, 3
        %s1258 = sadd.s32 %s1256, %s1257
        %s1259 = smul.addr %s1258, 8
        %s1260 = scalar_lea.vmem %s4, %s1259
        // Predicated region
        $region144: #{conv2d_same_padding.1} parent=134 // pred_check
          %p1261 = pneg %p149
        $region145: #{conv2d_same_padding.1} parent=134 // pred_check_branch
          %1263 = sbr.rel (%p1261) target = $region147
        $region146: #{conv2d_same_padding.1} parent=134 // pred_region
          %s1264 = smul.u32 3, %s20
        $region147: #{conv2d_same_padding.1} parent=134 // pred_fallthru
          _
      $region135: #{conv2d_same_padding.1} parent=5 // pred_fallthru
        _
      %p1265 = scmp.le.s32.totalorder 2, %s10
      // Predicated region
      $region148: #{conv2d_same_padding.1} parent=5 // pred_check
        %p1266 = pneg %p1265
      $region149: #{conv2d_same_padding.1} parent=5 // pred_check_branch
        %1268 = sbr.rel (%p1266) target = $region151
      $region150: #{conv2d_same_padding.1} parent=5 // pred_region
        %s1269 = ssub.s32 %s10, 2
        // Predicated region
        $region152: #{conv2d_same_padding.1} parent=150 // pred_check
          %p1270 = pneg %p155
        $region153: #{conv2d_same_padding.1} parent=150 // pred_check_branch
          %1272 = sbr.rel (%p1270) target = $region155
        $region154: #{conv2d_same_padding.1} parent=150 // pred_region
          %s1273 = smul.u32 3, %s22
          %p1274 = scmp.lt.s32.totalorder %s21, 1
          %s1275 = scalar_select %p1274, %s21, 1
          %p1276 = scmp.lt.s32.totalorder %s1273, 2
          %s1277 = scalar_select %p1276, %s1273, 2
          %s1278 = smul.addr %s1275, 3
          %s1279 = sadd.s32 %s1277, %s1278
          %s1280 = smul.addr %s1279, 8
          %s1281 = scalar_lea.vmem %s4, %s1280
        $region155: #{conv2d_same_padding.1} parent=150 // pred_fallthru
          _
      $region151: #{conv2d_same_padding.1} parent=5 // pred_fallthru
        _
    $region6: #{conv2d_same_padding.1} parent=1 // loop_footer
      %s14 = sadd.s32 1, %s10
    $region7: #{conv2d_same_padding.1} parent=1 // loop_footer_branch
      %9 = sbr.rel target = $region3
    $region8: #{conv2d_same_padding.1} parent=1 // loop_exit
      _

</llo_original>
